<compile_context>
chip_gen: v7x
topology: tpu7x:2x2x1
jax: 0.10.0
libtpu: 0.0.40
codegen_flags: <defaults>
</compile_context>

<pallas_src>
import functools

import jax
import jax.numpy as jnp
from jax.experimental import pallas as pl
from jax.experimental.pallas import tpu as pltpu

EPS = 1e-5


# ------------------------------ kernels ------------------------------------ #

def _shifted_rows(x, H, WC):
    """Stack rows (h-1, h, h+1) along lanes -> (H, 3*WC); zero rows at H edges."""
    zero = jnp.zeros((1, WC), x.dtype)
    x_up = jnp.concatenate([zero, x[:H - 1, :]], axis=0)   # row h-1
    x_dn = jnp.concatenate([x[1:, :], zero], axis=0)       # row h+1
    return jnp.concatenate([x_up, x, x_dn], axis=1)        # (H, 3*WC)


def _conv1_kernel(x_ref, w_ref, y_ref, st_ref, *, H, WC):
    # conv3x3 (no bias: it cancels exactly under train-mode BN) as ONE matmul
    # against the banded weight, plus fused per-(w,c) BN partial statistics
    # (sum / sum-of-squares over H, lane-dense).  The tiny (N, W) finish of the
    # reduction happens in JAX glue.
    x = x_ref[0]                                            # (H, WC)
    xs = _shifted_rows(x, H, WC)                            # (H, 3*WC)
    y = jnp.dot(xs, w_ref[...], preferred_element_type=jnp.float32)
    y_ref[0] = y.astype(y_ref.dtype)
    s = jnp.sum(y, axis=0, keepdims=True)                   # (1, WC)
    sq = jnp.sum(y * y, axis=0, keepdims=True)              # (1, WC)
    st_ref[0] = jnp.concatenate([s, sq], axis=0)            # (2, WC)


def _conv2_kernel(y1_ref, s1_ref, t1_ref, w_ref, y_ref, st_ref, *, H, WC):
    # Fused: h = relu(BN1(y1)) applied on the fly (scale/shift pre-broadcast to
    # the W*C lanes), then the banded 3x3 matmul, then BN2 partial stats.
    h = jnp.maximum(y1_ref[0] * s1_ref[...] + t1_ref[...], 0.0)
    xs = _shifted_rows(h, H, WC)
    y = jnp.dot(xs, w_ref[...], preferred_element_type=jnp.float32)
    y_ref[0] = y.astype(y_ref.dtype)
    s = jnp.sum(y, axis=0, keepdims=True)
    sq = jnp.sum(y * y, axis=0, keepdims=True)
    st_ref[0] = jnp.concatenate([s, sq], axis=0)


def _bn_add_relu_kernel(y_ref, r_ref, s_ref, t_ref, o_ref):
    # relu(BN2(y2) + x), everything lane-dense (H, W*C).
    o_ref[0] = jnp.maximum(
        y_ref[0] * s_ref[...] + t_ref[...] + r_ref[0], 0.0).astype(o_ref.dtype)


# ------------------------------ wrappers ------------------------------------ #

def _band_weight(w, W):
    """Fold kw taps + channel mixing + W zero-padding into a matmul weight.

    band[(kh, w_in, ci), (w_out, co)] = w[kh, w_in - w_out + 1, ci, co]
    when |w_in - w_out| <= 1, else 0.   Shape: (3*W*Cin, W*Cout).
    """
    Cin, Cout = w.shape[2], w.shape[3]
    # E[kw, w_in, w_out] = 1 iff w_in == w_out + (kw - 1)
    shifts = jnp.stack([jnp.eye(W, W, k=-(kw - 1), dtype=w.dtype)
                        for kw in range(3)])
    band = jnp.einsum('kxy,hkio->hxiyo', shifts, w)         # (3, W, Cin, W, Cout)
    return band.reshape(3 * W * Cin, W * Cout)


def _conv_call(x_ld, wband, scale=None, shift=None):
    """One fused conv pass over the batch.  Returns (y_ld, stats(N,2,W*C))."""
    N, H, WC = x_ld.shape
    K = wband.shape[0]
    if scale is None:
        kernel = functools.partial(_conv1_kernel, H=H, WC=WC)
        args = (x_ld, wband)
        in_specs = [
            pl.BlockSpec((1, H, WC), lambda n: (n, 0, 0)),
            pl.BlockSpec((K, WC), lambda n: (0, 0)),
        ]
    else:
        kernel = functools.partial(_conv2_kernel, H=H, WC=WC)
        args = (x_ld, scale.reshape(1, WC), shift.reshape(1, WC), wband)
        in_specs = [
            pl.BlockSpec((1, H, WC), lambda n: (n, 0, 0)),
            pl.BlockSpec((1, WC), lambda n: (0, 0)),
            pl.BlockSpec((1, WC), lambda n: (0, 0)),
            pl.BlockSpec((K, WC), lambda n: (0, 0)),
        ]
    return pl.pallas_call(
        kernel,
        out_shape=(jax.ShapeDtypeStruct((N, H, WC), x_ld.dtype),
                   jax.ShapeDtypeStruct((N, 2, WC), jnp.float32)),
        grid=(N,),
        in_specs=in_specs,
        out_specs=(pl.BlockSpec((1, H, WC), lambda n: (n, 0, 0)),
                   pl.BlockSpec((1, 2, WC), lambda n: (n, 0, 0))),
        compiler_params=pltpu.CompilerParams(
            dimension_semantics=("parallel",)),
    )(*args)


def _bn_add_relu(y_ld, x_ld, scale_wc, shift_wc):
    N, H, WC = y_ld.shape
    return pl.pallas_call(
        _bn_add_relu_kernel,
        out_shape=jax.ShapeDtypeStruct((N, H, WC), y_ld.dtype),
        grid=(N,),
        in_specs=[
            pl.BlockSpec((1, H, WC), lambda n: (n, 0, 0)),
            pl.BlockSpec((1, H, WC), lambda n: (n, 0, 0)),
            pl.BlockSpec((1, WC), lambda n: (0, 0)),
            pl.BlockSpec((1, WC), lambda n: (0, 0)),
        ],
        out_specs=pl.BlockSpec((1, H, WC), lambda n: (n, 0, 0)),
        compiler_params=pltpu.CompilerParams(
            dimension_semantics=("parallel",)),
    )(y_ld, x_ld, scale_wc.reshape(1, WC), shift_wc.reshape(1, WC))


def _bn_scale_shift_from_stats(stats, gamma, beta, N, H, W, C):
    """Finish the BN reduction from per-image (sum, sumsq over H) partials."""
    s = stats[:, 0, :].reshape(N, W, C).sum(axis=(0, 1))
    sq = stats[:, 1, :].reshape(N, W, C).sum(axis=(0, 1))
    count = N * H * W
    mu = s / count
    var = sq / count - mu * mu                      # biased (PyTorch train mode)
    scale = gamma * jax.lax.rsqrt(var + EPS)
    shift = beta - mu * scale
    # per-channel -> lane-dense (W*C,) vector, index (w*C + c)
    return jnp.tile(scale, W), jnp.tile(shift, W)


@jax.jit
def residue_block(x_nchw, params):
    """Forward pass of ResidueBlock.  Input/output are NCHW (PyTorch layout)."""
    N, C, H, W = x_nchw.shape
    WC = W * C
    # NCHW -> lane-dense (N, H, W*C).  Tiny boundary relayout in JAX.
    # TODO(synk): fold this relayout into the first/last kernels' loads/stores.
    x_ld = jnp.transpose(x_nchw, (0, 2, 3, 1)).reshape(N, H, WC)

    wband1 = _band_weight(params["w1"], W)
    wband2 = _band_weight(params["w2"], W)
    # (Conv biases are dropped on purpose: they cancel exactly in train-mode BN.)

    y1, st1 = _conv_call(x_ld, wband1)
    s1, t1 = _bn_scale_shift_from_stats(
        st1, params["gamma1"], params["beta1"], N, H, W, C)

    y2, st2 = _conv_call(y1, wband2, s1, t1)         # BN1+ReLU fused into conv2
    s2, t2 = _bn_scale_shift_from_stats(
        st2, params["gamma2"], params["beta2"], N, H, W, C)

    out_ld = _bn_add_relu(y2, x_ld, s2, t2)          # relu(BN2(conv2(h)) + x)
    return jnp.transpose(out_ld.reshape(N, H, W, C), (0, 3, 1, 2))


# ------------------------------ reference ----------------------------------- #

def residue_block_ref(x, p):
    """Pure-JAX (XLA conv) reference, faithful to the PyTorch module."""
    def conv(x, w, b):
        wt = jnp.transpose(w, (3, 2, 0, 1))          # (3,3,Ci,Co)->(Co,Ci,3,3)
        y = jax.lax.conv_general_dilated(
            x, wt, (1, 1), ((1, 1), (1, 1)),
            dimension_numbers=("NCHW", "OIHW", "NCHW"))
        return y + b[None, :, None, None]

    def bn(y, gamma, beta):
        mu = jnp.mean(y, axis=(0, 2, 3), keepdims=True)
        var = jnp.var(y, axis=(0, 2, 3), keepdims=True)
        return ((y - mu) / jnp.sqrt(var + EPS)) * gamma[None, :, None, None] \
            + beta[None, :, None, None]

    out = jax.nn.relu(bn(conv(x, p["w1"], p["b1"]), p["gamma1"], p["beta1"]))
    out = bn(conv(out, p["w2"], p["b2"]), p["gamma2"], p["beta2"])
    return jax.nn.relu(out + x)


# -------------------------------- main --------------------------------------- #

if __name__ == "__main__":
    key = jax.random.PRNGKey(0)
    # Small shapes; W * C = 16 * 8 = 128 so the lane axis is exactly full.
    N, C, H, W = 2, 8, 16, 16

    k_x, k_w1, k_b1, k_w2, k_b2 = jax.random.split(key, 5)
    x = jax.random.normal(k_x, (N, C, H, W), jnp.float32)

    params = {
        # conv weights stored as (kh, kw, Cin, Cout)
        "w1": 0.1 * jax.random.normal(k_w1, (3, 3, C, C), jnp.float32),
        "b1": 0.05 * jax.random.normal(k_b1, (C,), jnp.float32),
        "w2": 0.1 * jax.random.normal(k_w2, (3, 3, C, C), jnp.float32),
        "b2": 0.05 * jax.random.normal(k_b2, (C,), jnp.float32),
        # BatchNorm affine params at PyTorch default init
        "gamma1": jnp.ones((C,), jnp.float32),
        "beta1": jnp.zeros((C,), jnp.float32),
        "gamma2": jnp.ones((C,), jnp.float32),
        "beta2": jnp.zeros((C,), jnp.float32),
    }

    out = jax.block_until_ready(residue_block(x, params))
    ref = jax.block_until_ready(residue_block_ref(x, params))

    assert out.shape == (N, C, H, W)
    assert jnp.allclose(out, ref, atol=1e-4, rtol=1e-4), "mismatch vs reference"

    print("KERNEL_OK")
</pallas_src>

<mosaic_0001>
module attributes {stable_mosaic.version = 11 : i64} {
  func.func @_conv1_kernel(%arg0: i32, %arg1: memref<1x16x128xf32, #tpu.memory_space<vmem>>, %arg2: memref<384x128xf32, #tpu.memory_space<vmem>>, %arg3: memref<1x16x128xf32, #tpu.memory_space<vmem>>, %arg4: memref<1x2x128xf32, #tpu.memory_space<vmem>>) attributes {dimension_semantics = [#tpu.dimension_semantics<parallel>], iteration_bounds = array<i64: 2>, scalar_prefetch = 0 : i64, scratch_operands = 0 : i64, tpu.core_type = #tpu.core_type<tc>, window_params = [{transform_indices = @transform_0, window_bounds = array<i64: 1, 16, 128>}, {pipeline_mode = #tpu.pipeline_mode<synchronous>, transform_indices = @transform_1, window_bounds = array<i64: 384, 128>}, {transform_indices = @transform_2, window_bounds = array<i64: 1, 16, 128>}, {transform_indices = @transform_3, window_bounds = array<i64: 1, 2, 128>}]} {
    %c0 = arith.constant 0 : index
    %c0_0 = arith.constant 0 : index
    %c0_1 = arith.constant 0 : index
    %0 = vector.load %arg1[%c0, %c0_0, %c0_1] : memref<1x16x128xf32, #tpu.memory_space<vmem>>, vector<1x16x128xf32>
    %1 = vector.shape_cast %0 : vector<1x16x128xf32> to vector<16x128xf32>
    %cst = arith.constant 0.000000e+00 : f32
    %2 = vector.broadcast %cst : f32 to vector<1x128xf32>
    %3 = vector.extract_strided_slice %1 {offsets = [0, 0], sizes = [15, 128], strides = [1, 1]} : vector<16x128xf32> to vector<15x128xf32>
    %4 = tpu.concatenate %2, %3 in 0 : vector<1x128xf32>, vector<15x128xf32> -> vector<16x128xf32>
    %5 = vector.extract_strided_slice %1 {offsets = [1, 0], sizes = [15, 128], strides = [1, 1]} : vector<16x128xf32> to vector<15x128xf32>
    %6 = tpu.concatenate %5, %2 in 0 : vector<15x128xf32>, vector<1x128xf32> -> vector<16x128xf32>
    %7 = tpu.concatenate %4, %1, %6 in 1 : vector<16x128xf32>, vector<16x128xf32>, vector<16x128xf32> -> vector<16x384xf32>
    %c0_2 = arith.constant 0 : index
    %c0_3 = arith.constant 0 : index
    %8 = vector.load %arg2[%c0_2, %c0_3] : memref<384x128xf32, #tpu.memory_space<vmem>>, vector<384x128xf32>
    %cst_4 = arith.constant dense<0.000000e+00> : vector<16x128xf32>
    %9 = tpu.matmul %7, %8, %cst_4 {dimension_numbers = #tpu.dot_dimension_numbers<[1], [0], [0], [1], [0, 0, 1, 1], [], []>} : vector<16x384xf32>, vector<384x128xf32>, vector<16x128xf32> -> vector<16x128xf32>
    %c0_5 = arith.constant 0 : index
    %c0_6 = arith.constant 0 : index
    %c0_7 = arith.constant 0 : index
    %10 = vector.load %arg3[%c0_5, %c0_6, %c0_7] : memref<1x16x128xf32, #tpu.memory_space<vmem>>, vector<1x16x128xf32>
    %11 = vector.shape_cast %10 : vector<1x16x128xf32> to vector<16x128xf32>
    %12 = vector.shape_cast %9 : vector<16x128xf32> to vector<1x16x128xf32>
    tpu.vector_store %arg3[%c0_5, %c0_6, %c0_7], %12 {strides = array<i32>} : memref<1x16x128xf32, #tpu.memory_space<vmem>>, vector<1x16x128xf32>,
    %cst_8 = arith.constant dense<0.000000e+00> : vector<128xf32>
    %13 = vector.multi_reduction <add>, %9, %cst_8 [0] : vector<16x128xf32> to vector<128xf32>
    %14 = vector.shape_cast %13 : vector<128xf32> to vector<1x128xf32>
    %15 = arith.mulf %9, %9 : vector<16x128xf32>
    %cst_9 = arith.constant dense<0.000000e+00> : vector<128xf32>
    %16 = vector.multi_reduction <add>, %15, %cst_9 [0] : vector<16x128xf32> to vector<128xf32>
    %17 = vector.shape_cast %16 : vector<128xf32> to vector<1x128xf32>
    %18 = tpu.concatenate %14, %17 in 0 : vector<1x128xf32>, vector<1x128xf32> -> vector<2x128xf32>
    %c0_10 = arith.constant 0 : index
    %c0_11 = arith.constant 0 : index
    %c0_12 = arith.constant 0 : index
    %19 = vector.load %arg4[%c0_10, %c0_11, %c0_12] : memref<1x2x128xf32, #tpu.memory_space<vmem>>, vector<1x2x128xf32>
    %20 = vector.shape_cast %19 : vector<1x2x128xf32> to vector<2x128xf32>
    %21 = vector.shape_cast %18 : vector<2x128xf32> to vector<1x2x128xf32>
    tpu.vector_store %arg4[%c0_10, %c0_11, %c0_12], %21 {strides = array<i32>} : memref<1x2x128xf32, #tpu.memory_space<vmem>>, vector<1x2x128xf32>,
    return
  }
  func.func @transform_0(%arg0: i32) -> (i32, i32, i32) {
    %c0_i32 = arith.constant 0 : i32
    %c0_i32_0 = arith.constant 0 : i32
    %c0_i32_1 = arith.constant 0 : i32
    return %arg0, %c0_i32, %c0_i32_0 : i32, i32, i32
  }
  func.func @transform_1(%arg0: i32) -> (i32, i32) {
    %c0_i32 = arith.constant 0 : i32
    %c0_i32_0 = arith.constant 0 : i32
    %c0_i32_1 = arith.constant 0 : i32
    return %c0_i32, %c0_i32_0 : i32, i32
  }
  func.func @transform_2(%arg0: i32) -> (i32, i32, i32) {
    %c0_i32 = arith.constant 0 : i32
    %c0_i32_0 = arith.constant 0 : i32
    %c0_i32_1 = arith.constant 0 : i32
    return %arg0, %c0_i32, %c0_i32_0 : i32, i32, i32
  }
  func.func @transform_3(%arg0: i32) -> (i32, i32, i32) {
    %c0_i32 = arith.constant 0 : i32
    %c0_i32_0 = arith.constant 0 : i32
    %c0_i32_1 = arith.constant 0 : i32
    return %arg0, %c0_i32, %c0_i32_0 : i32, i32, i32
  }
}

module attributes {stable_mosaic.version = 11 : i64} {
  func.func @_bn_add_relu_kernel(%arg0: i32, %arg1: memref<1x16x128xf32, #tpu.memory_space<vmem>>, %arg2: memref<1x16x128xf32, #tpu.memory_space<vmem>>, %arg3: memref<1x128xf32, #tpu.memory_space<vmem>>, %arg4: memref<1x128xf32, #tpu.memory_space<vmem>>, %arg5: memref<1x16x128xf32, #tpu.memory_space<vmem>>) attributes {dimension_semantics = [#tpu.dimension_semantics<parallel>], iteration_bounds = array<i64: 2>, scalar_prefetch = 0 : i64, scratch_operands = 0 : i64, tpu.core_type = #tpu.core_type<tc>, window_params = [{transform_indices = @transform_0, window_bounds = array<i64: 1, 16, 128>}, {transform_indices = @transform_1, window_bounds = array<i64: 1, 16, 128>}, {pipeline_mode = #tpu.pipeline_mode<synchronous>, transform_indices = @transform_2, window_bounds = array<i64: 1, 128>}, {pipeline_mode = #tpu.pipeline_mode<synchronous>, transform_indices = @transform_3, window_bounds = array<i64: 1, 128>}, {transform_indices = @transform_4, window_bounds = array<i64: 1, 16, 128>}]} {
    %c0 = arith.constant 0 : index
    %c0_0 = arith.constant 0 : index
    %c0_1 = arith.constant 0 : index
    %0 = vector.load %arg1[%c0, %c0_0, %c0_1] : memref<1x16x128xf32, #tpu.memory_space<vmem>>, vector<1x16x128xf32>
    %1 = vector.shape_cast %0 : vector<1x16x128xf32> to vector<16x128xf32>
    %c0_2 = arith.constant 0 : index
    %c0_3 = arith.constant 0 : index
    %2 = vector.load %arg3[%c0_2, %c0_3] : memref<1x128xf32, #tpu.memory_space<vmem>>, vector<1x128xf32>
    %3 = vector.broadcast %2 : vector<1x128xf32> to vector<16x128xf32>
    %4 = arith.mulf %1, %3 : vector<16x128xf32>
    %c0_4 = arith.constant 0 : index
    %c0_5 = arith.constant 0 : index
    %5 = vector.load %arg4[%c0_4, %c0_5] : memref<1x128xf32, #tpu.memory_space<vmem>>, vector<1x128xf32>
    %6 = vector.broadcast %5 : vector<1x128xf32> to vector<16x128xf32>
    %7 = arith.addf %4, %6 : vector<16x128xf32>
    %c0_6 = arith.constant 0 : index
    %c0_7 = arith.constant 0 : index
    %c0_8 = arith.constant 0 : index
    %8 = vector.load %arg2[%c0_6, %c0_7, %c0_8] : memref<1x16x128xf32, #tpu.memory_space<vmem>>, vector<1x16x128xf32>
    %9 = vector.shape_cast %8 : vector<1x16x128xf32> to vector<16x128xf32>
    %10 = arith.addf %7, %9 : vector<16x128xf32>
    %cst = arith.constant 0.000000e+00 : f32
    %11 = vector.broadcast %cst : f32 to vector<16x128xf32>
    %12 = arith.maximumf %10, %11 : vector<16x128xf32>
    %c0_9 = arith.constant 0 : index
    %c0_10 = arith.constant 0 : index
    %c0_11 = arith.constant 0 : index
    %13 = vector.load %arg5[%c0_9, %c0_10, %c0_11] : memref<1x16x128xf32, #tpu.memory_space<vmem>>, vector<1x16x128xf32>
    %14 = vector.shape_cast %13 : vector<1x16x128xf32> to vector<16x128xf32>
    %15 = vector.shape_cast %12 : vector<16x128xf32> to vector<1x16x128xf32>
    tpu.vector_store %arg5[%c0_9, %c0_10, %c0_11], %15 {strides = array<i32>} : memref<1x16x128xf32, #tpu.memory_space<vmem>>, vector<1x16x128xf32>,
    return
  }
  func.func @transform_0(%arg0: i32) -> (i32, i32, i32) {
    %c0_i32 = arith.constant 0 : i32
    %c0_i32_0 = arith.constant 0 : i32
    %c0_i32_1 = arith.constant 0 : i32
    return %arg0, %c0_i32, %c0_i32_0 : i32, i32, i32
  }
  func.func @transform_1(%arg0: i32) -> (i32, i32, i32) {
    %c0_i32 = arith.constant 0 : i32
    %c0_i32_0 = arith.constant 0 : i32
    %c0_i32_1 = arith.constant 0 : i32
    return %arg0, %c0_i32, %c0_i32_0 : i32, i32, i32
  }
  func.func @transform_2(%arg0: i32) -> (i32, i32) {
    %c0_i32 = arith.constant 0 : i32
    %c0_i32_0 = arith.constant 0 : i32
    %c0_i32_1 = arith.constant 0 : i32
    return %c0_i32, %c0_i32_0 : i32, i32
  }
  func.func @transform_3(%arg0: i32) -> (i32, i32) {
    %c0_i32 = arith.constant 0 : i32
    %c0_i32_0 = arith.constant 0 : i32
    %c0_i32_1 = arith.constant 0 : i32
    return %c0_i32, %c0_i32_0 : i32, i32
  }
  func.func @transform_4(%arg0: i32) -> (i32, i32, i32) {
    %c0_i32 = arith.constant 0 : i32
    %c0_i32_0 = arith.constant 0 : i32
    %c0_i32_1 = arith.constant 0 : i32
    return %arg0, %c0_i32, %c0_i32_0 : i32, i32, i32
  }
}

module attributes {stable_mosaic.version = 11 : i64} {
  func.func @_conv2_kernel(%arg0: i32, %arg1: memref<1x16x128xf32, #tpu.memory_space<vmem>>, %arg2: memref<1x128xf32, #tpu.memory_space<vmem>>, %arg3: memref<1x128xf32, #tpu.memory_space<vmem>>, %arg4: memref<384x128xf32, #tpu.memory_space<vmem>>, %arg5: memref<1x16x128xf32, #tpu.memory_space<vmem>>, %arg6: memref<1x2x128xf32, #tpu.memory_space<vmem>>) attributes {dimension_semantics = [#tpu.dimension_semantics<parallel>], iteration_bounds = array<i64: 2>, scalar_prefetch = 0 : i64, scratch_operands = 0 : i64, tpu.core_type = #tpu.core_type<tc>, window_params = [{transform_indices = @transform_0, window_bounds = array<i64: 1, 16, 128>}, {pipeline_mode = #tpu.pipeline_mode<synchronous>, transform_indices = @transform_1, window_bounds = array<i64: 1, 128>}, {pipeline_mode = #tpu.pipeline_mode<synchronous>, transform_indices = @transform_2, window_bounds = array<i64: 1, 128>}, {pipeline_mode = #tpu.pipeline_mode<synchronous>, transform_indices = @transform_3, window_bounds = array<i64: 384, 128>}, {transform_indices = @transform_4, window_bounds = array<i64: 1, 16, 128>}, {transform_indices = @transform_5, window_bounds = array<i64: 1, 2, 128>}]} {
    %c0 = arith.constant 0 : index
    %c0_0 = arith.constant 0 : index
    %c0_1 = arith.constant 0 : index
    %0 = vector.load %arg1[%c0, %c0_0, %c0_1] : memref<1x16x128xf32, #tpu.memory_space<vmem>>, vector<1x16x128xf32>
    %1 = vector.shape_cast %0 : vector<1x16x128xf32> to vector<16x128xf32>
    %c0_2 = arith.constant 0 : index
    %c0_3 = arith.constant 0 : index
    %2 = vector.load %arg2[%c0_2, %c0_3] : memref<1x128xf32, #tpu.memory_space<vmem>>, vector<1x128xf32>
    %3 = vector.broadcast %2 : vector<1x128xf32> to vector<16x128xf32>
    %4 = arith.mulf %1, %3 : vector<16x128xf32>
    %c0_4 = arith.constant 0 : index
    %c0_5 = arith.constant 0 : index
    %5 = vector.load %arg3[%c0_4, %c0_5] : memref<1x128xf32, #tpu.memory_space<vmem>>, vector<1x128xf32>
    %6 = vector.broadcast %5 : vector<1x128xf32> to vector<16x128xf32>
    %7 = arith.addf %4, %6 : vector<16x128xf32>
    %cst = arith.constant 0.000000e+00 : f32
    %8 = vector.broadcast %cst : f32 to vector<16x128xf32>
    %9 = arith.maximumf %7, %8 : vector<16x128xf32>
    %cst_6 = arith.constant 0.000000e+00 : f32
    %10 = vector.broadcast %cst_6 : f32 to vector<1x128xf32>
    %11 = vector.extract_strided_slice %9 {offsets = [0, 0], sizes = [15, 128], strides = [1, 1]} : vector<16x128xf32> to vector<15x128xf32>
    %12 = tpu.concatenate %10, %11 in 0 : vector<1x128xf32>, vector<15x128xf32> -> vector<16x128xf32>
    %13 = vector.extract_strided_slice %9 {offsets = [1, 0], sizes = [15, 128], strides = [1, 1]} : vector<16x128xf32> to vector<15x128xf32>
    %14 = tpu.concatenate %13, %10 in 0 : vector<15x128xf32>, vector<1x128xf32> -> vector<16x128xf32>
    %15 = tpu.concatenate %12, %9, %14 in 1 : vector<16x128xf32>, vector<16x128xf32>, vector<16x128xf32> -> vector<16x384xf32>
    %c0_7 = arith.constant 0 : index
    %c0_8 = arith.constant 0 : index
    %16 = vector.load %arg4[%c0_7, %c0_8] : memref<384x128xf32, #tpu.memory_space<vmem>>, vector<384x128xf32>
    %cst_9 = arith.constant dense<0.000000e+00> : vector<16x128xf32>
    %17 = tpu.matmul %15, %16, %cst_9 {dimension_numbers = #tpu.dot_dimension_numbers<[1], [0], [0], [1], [0, 0, 1, 1], [], []>} : vector<16x384xf32>, vector<384x128xf32>, vector<16x128xf32> -> vector<16x128xf32>
    %c0_10 = arith.constant 0 : index
    %c0_11 = arith.constant 0 : index
    %c0_12 = arith.constant 0 : index
    %18 = vector.load %arg5[%c0_10, %c0_11, %c0_12] : memref<1x16x128xf32, #tpu.memory_space<vmem>>, vector<1x16x128xf32>
    %19 = vector.shape_cast %18 : vector<1x16x128xf32> to vector<16x128xf32>
    %20 = vector.shape_cast %17 : vector<16x128xf32> to vector<1x16x128xf32>
    tpu.vector_store %arg5[%c0_10, %c0_11, %c0_12], %20 {strides = array<i32>} : memref<1x16x128xf32, #tpu.memory_space<vmem>>, vector<1x16x128xf32>,
    %cst_13 = arith.constant dense<0.000000e+00> : vector<128xf32>
    %21 = vector.multi_reduction <add>, %17, %cst_13 [0] : vector<16x128xf32> to vector<128xf32>
    %22 = vector.shape_cast %21 : vector<128xf32> to vector<1x128xf32>
    %23 = arith.mulf %17, %17 : vector<16x128xf32>
    %cst_14 = arith.constant dense<0.000000e+00> : vector<128xf32>
    %24 = vector.multi_reduction <add>, %23, %cst_14 [0] : vector<16x128xf32> to vector<128xf32>
    %25 = vector.shape_cast %24 : vector<128xf32> to vector<1x128xf32>
    %26 = tpu.concatenate %22, %25 in 0 : vector<1x128xf32>, vector<1x128xf32> -> vector<2x128xf32>
    %c0_15 = arith.constant 0 : index
    %c0_16 = arith.constant 0 : index
    %c0_17 = arith.constant 0 : index
    %27 = vector.load %arg6[%c0_15, %c0_16, %c0_17] : memref<1x2x128xf32, #tpu.memory_space<vmem>>, vector<1x2x128xf32>
    %28 = vector.shape_cast %27 : vector<1x2x128xf32> to vector<2x128xf32>
    %29 = vector.shape_cast %26 : vector<2x128xf32> to vector<1x2x128xf32>
    tpu.vector_store %arg6[%c0_15, %c0_16, %c0_17], %29 {strides = array<i32>} : memref<1x2x128xf32, #tpu.memory_space<vmem>>, vector<1x2x128xf32>,
    return
  }
  func.func @transform_0(%arg0: i32) -> (i32, i32, i32) {
    %c0_i32 = arith.constant 0 : i32
    %c0_i32_0 = arith.constant 0 : i32
    %c0_i32_1 = arith.constant 0 : i32
    return %arg0, %c0_i32, %c0_i32_0 : i32, i32, i32
  }
  func.func @transform_1(%arg0: i32) -> (i32, i32) {
    %c0_i32 = arith.constant 0 : i32
    %c0_i32_0 = arith.constant 0 : i32
    %c0_i32_1 = arith.constant 0 : i32
    return %c0_i32, %c0_i32_0 : i32, i32
  }
  func.func @transform_2(%arg0: i32) -> (i32, i32) {
    %c0_i32 = arith.constant 0 : i32
    %c0_i32_0 = arith.constant 0 : i32
    %c0_i32_1 = arith.constant 0 : i32
    return %c0_i32, %c0_i32_0 : i32, i32
  }
  func.func @transform_3(%arg0: i32) -> (i32, i32) {
    %c0_i32 = arith.constant 0 : i32
    %c0_i32_0 = arith.constant 0 : i32
    %c0_i32_1 = arith.constant 0 : i32
    return %c0_i32, %c0_i32_0 : i32, i32
  }
  func.func @transform_4(%arg0: i32) -> (i32, i32, i32) {
    %c0_i32 = arith.constant 0 : i32
    %c0_i32_0 = arith.constant 0 : i32
    %c0_i32_1 = arith.constant 0 : i32
    return %arg0, %c0_i32, %c0_i32_0 : i32, i32, i32
  }
  func.func @transform_5(%arg0: i32) -> (i32, i32, i32) {
    %c0_i32 = arith.constant 0 : i32
    %c0_i32_0 = arith.constant 0 : i32
    %c0_i32_1 = arith.constant 0 : i32
    return %arg0, %c0_i32, %c0_i32_0 : i32, i32, i32
  }
}

</mosaic_0001>

<llo_original>
// kernel: residue_block.3
$region0: #{residue_block.3}
  #allocation0 [shape = 'u32[]', space=smem, size = 0x4, offset = 0x4, fixed_abs, tag = 'smem constant byte address 0x4 - core index']
  #allocation1 [shape = 'u32[144,128]{1,0:T(1,128)}', space=vmem, size = 0x12000, scoped, tag = 'internal scratch']
  %s0 = inlined_call_operand.vmem [shape: f32[2,16,128], index: 0, kind: input, shape index: {}]
  %s1 = inlined_call_operand.vmem [shape: f32[384,128], index: 1, kind: input, shape index: {}]
  %s2 = inlined_call_operand.vmem [shape: f32[2,16,128], index: 2, kind: output, shape index: {0}]
  %s3 = inlined_call_operand.vmem [shape: f32[2,2,128], index: 3, kind: output, shape index: {1}]
  %4 = xla_tuple %s2, %s3
  %s5 = sld [smem:[#allocation0]]
  $region49: #{residue_block.3} parent=0
    _
  %s7 = ssub.s32 1, %s5
  %s8 = scalar_select 0, %s7, %s5
  loop: start=0, step=1, limit=4
  $region2: #{residue_block.3} parent=0 // loop_pre_header
    _
  $region3: #{residue_block.3} parent=0 // loop_header
    %s10 = sphi 0, %s14
    %p11 = scmp.ge.s32.totalorder %s10, 4
    %s20 = sphi 0, %s22
    %s23 = sphi 0, %s20
    %s24 = sphi 0, %s23
    %s40 = sphi 0, %s24
    %s44 = sphi 0, %s44
    %s46 = sphi 0, %s44
    %s47 = sphi 0, %s46
    %s61 = sphi 0, %s47
    %s67 = sphi 0, %s69
    %s70 = sphi 0, %s67
    %s71 = sphi 0, %s70
    %s87 = sphi 0, %s71
    %s93 = sphi 0, %s95
    %s96 = sphi 0, %s93
    %s97 = sphi 0, %s96
    %s113 = sphi 0, %s97
  $region4: #{residue_block.3} parent=0 // loop_header_branch
    %13 = sbr.rel (%p11) target = $region8
  $region5: #{residue_block.3} parent=0 // loop_body
    %s15 = ssub.s32 %s10, 1
    %s16 = ssub.s32 %s10, 2
    %s17 = sadd.s32 %s10, 1
    %s18 = ssub.s32 %s10, %s17
    %p19 = scmp.eq.s32.totalorder %s18, 0
    %s21 = sadd.s32 %s20, 1
    %s22 = scalar_select %p19, %s20, %s21
    %p25 = pneg %p19
    %p26 = scmp.eq.s32.totalorder %s10, 1
    %p27 = por %p25, %p26
    %p28 = scmp.ne.s32.totalorder %s20, %s23
    %p29 = scmp.eq.s32.totalorder %s10, 0
    %p30 = por %p28, %p29
    %p31 = scmp.ne.s32.totalorder %s20, %s23
    %p32 = scmp.eq.s32.totalorder %s15, 1
    %p33 = por %p31, %p32
    %p34 = scmp.ne.s32.totalorder %s23, %s24
    %p35 = scmp.eq.s32.totalorder %s15, 0
    %p36 = por %p34, %p35
    %p37 = scmp.ne.s32.totalorder %s23, %s24
    %p38 = scmp.eq.s32.totalorder %s16, 1
    %p39 = por %p37, %p38
    %p41 = scmp.ne.s32.totalorder %s24, %s40
    %p42 = scmp.eq.s32.totalorder %s16, 0
    %p43 = por %p41, %p42
    %s45 = sadd.s32 %s44, 1
    %p48 = scmp.eq.s32.totalorder %s10, 1
    %p49 = scmp.ne.s32.totalorder %s44, %s46
    %p50 = scmp.eq.s32.totalorder %s10, 0
    %p51 = por %p49, %p50
    %p52 = scmp.ne.s32.totalorder %s44, %s46
    %p53 = scmp.eq.s32.totalorder %s15, 1
    %p54 = por %p52, %p53
    %p55 = scmp.ne.s32.totalorder %s46, %s47
    %p56 = scmp.eq.s32.totalorder %s15, 0
    %p57 = por %p55, %p56
    %p58 = scmp.ne.s32.totalorder %s46, %s47
    %p59 = scmp.eq.s32.totalorder %s16, 1
    %p60 = por %p58, %p59
    %p62 = scmp.ne.s32.totalorder %s47, %s61
    %p63 = scmp.eq.s32.totalorder %s16, 0
    %p64 = por %p62, %p63
    %s65 = ssub.s32 %s10, %s17
    %p66 = scmp.eq.s32.totalorder %s65, 0
    %s68 = sadd.s32 %s67, 1
    %s69 = scalar_select %p66, %s67, %s68
    %p72 = pneg %p66
    %p73 = scmp.eq.s32.totalorder %s10, 1
    %p74 = por %p72, %p73
    %p75 = scmp.ne.s32.totalorder %s67, %s70
    %p76 = scmp.eq.s32.totalorder %s10, 0
    %p77 = por %p75, %p76
    %p78 = scmp.ne.s32.totalorder %s67, %s70
    %p79 = scmp.eq.s32.totalorder %s15, 1
    %p80 = por %p78, %p79
    %p81 = scmp.ne.s32.totalorder %s70, %s71
    %p82 = scmp.eq.s32.totalorder %s15, 0
    %p83 = por %p81, %p82
    %p84 = scmp.ne.s32.totalorder %s70, %s71
    %p85 = scmp.eq.s32.totalorder %s16, 1
    %p86 = por %p84, %p85
    %p88 = scmp.ne.s32.totalorder %s71, %s87
    %p89 = scmp.eq.s32.totalorder %s16, 0
    %p90 = por %p88, %p89
    %s91 = ssub.s32 %s10, %s17
    %p92 = scmp.eq.s32.totalorder %s91, 0
    %s94 = sadd.s32 %s93, 1
    %s95 = scalar_select %p92, %s93, %s94
    %p98 = pneg %p92
    %p99 = scmp.eq.s32.totalorder %s10, 1
    %p100 = por %p98, %p99
    %p101 = scmp.ne.s32.totalorder %s93, %s96
    %p102 = scmp.eq.s32.totalorder %s10, 0
    %p103 = por %p101, %p102
    %p104 = scmp.ne.s32.totalorder %s93, %s96
    %p105 = scmp.eq.s32.totalorder %s15, 1
    %p106 = por %p104, %p105
    %p107 = scmp.ne.s32.totalorder %s96, %s97
    %p108 = scmp.eq.s32.totalorder %s15, 0
    %p109 = por %p107, %p108
    %p110 = scmp.ne.s32.totalorder %s96, %s97
    %p111 = scmp.eq.s32.totalorder %s16, 1
    %p112 = por %p110, %p111
    %p114 = scmp.ne.s32.totalorder %s97, %s113
    %p115 = scmp.eq.s32.totalorder %s16, 0
    %p116 = por %p114, %p115
    %p117 = scmp.le.s32.totalorder 1, %s10
    %p118 = scmp.lt.s32.totalorder %s10, 3
    %p119 = pnand %p117, %p118
    %p120 = pneg %p119
    // Predicated region
    $region9: #{residue_block.3} parent=5 // pred_check
      _
    $region10: #{residue_block.3} parent=5 // pred_check_branch
      %122 = sbr.rel (%p119) target = $region12
    $region11: #{residue_block.3} parent=5 // pred_region
      %s123 = ssub.s32 %s10, 1
      // Predicated region
      $region13: #{residue_block.3} parent=11 // pred_check
        %p124 = pneg %p57
      $region14: #{residue_block.3} parent=11 // pred_check_branch
        %126 = sbr.rel (%p124) target = $region16
      $region15: #{residue_block.3} parent=11 // pred_region
        _
      $region16: #{residue_block.3} parent=11 // pred_fallthru
        _
    $region12: #{residue_block.3} parent=5 // pred_fallthru
      _
    %p127 = scmp.lt.s32.totalorder %s10, 2
    // Predicated region
    $region17: #{residue_block.3} parent=5 // pred_check
      %p128 = pneg %p127
    $region18: #{residue_block.3} parent=5 // pred_check_branch
      %130 = sbr.rel (%p128) target = $region20
    $region19: #{residue_block.3} parent=5 // pred_region
      // Predicated region
      $region21: #{residue_block.3} parent=19 // pred_check
        %p131 = pneg %p30
      $region22: #{residue_block.3} parent=19 // pred_check_branch
        %133 = sbr.rel (%p131) target = $region24
      $region23: #{residue_block.3} parent=19 // pred_region
        %p134 = scmp.lt.s32.totalorder %s10, 1
        %s135 = scalar_select %p134, %s10, 1
        %s136 = smul.addr %s135, 2
        %s137 = smul.addr %s136, 8
        %s138 = scalar_lea.vmem %s0, %s137
      $region24: #{residue_block.3} parent=19 // pred_fallthru
        _
    $region20: #{residue_block.3} parent=5 // pred_fallthru
      _
    %p139 = scmp.le.s32.totalorder 1, %s10
    %p140 = scmp.lt.s32.totalorder %s10, 3
    %p141 = pnand %p139, %p140
    %p142 = pneg %p141
    // Predicated region
    $region25: #{residue_block.3} parent=5 // pred_check
      _
    $region26: #{residue_block.3} parent=5 // pred_check_branch
      %144 = sbr.rel (%p141) target = $region28
    $region27: #{residue_block.3} parent=5 // pred_region
      %s145 = ssub.s32 %s10, 1
      %p146 = scmp.lt.s32.totalorder %s15, 1
      %s147 = scalar_select %p146, %s15, 1
      %s148 = smul.addr %s147, 2
      %s149 = smul.addr %s148, 8
      %s150 = scalar_lea.vmem %s0, %s149
      %p151 = pneg %p36
      %p152 = pneg %p33
      %p153 = pneg %p57
      %p154 = pneg %p54
      %p155 = pneg %p83
      %p156 = pneg %p80
      %p157 = scmp.lt.s32.totalorder %s15, 1
      %s158 = scalar_select %p157, %s15, 1
      %s159 = smul.addr %s158, 2
      %s160 = smul.addr %s159, 8
      %s161 = scalar_lea.vmem %s2, %s160
      %p162 = pneg %p109
      %p163 = pneg %p106
      %p164 = scmp.lt.s32.totalorder %s15, 1
      %s165 = scalar_select %p164, %s15, 1
      %s166 = smul.addr %s165, 2
      %s167 = scalar_lea.vmem %s3, %s166
      %p168 = scmp.lt.s32.totalorder %s15, 1
      %s169 = scalar_select %p168, %s15, 1
      %s170 = smul.addr %s169, 2
      %s171 = smul.addr %s170, 8
      %s172 = scalar_lea.vmem %s0, %s171
      %p173 = scmp.lt.s32.totalorder %s15, 1
      %s174 = scalar_select %p173, %s15, 1
      %s175 = smul.addr %s174, 2
      %s176 = smul.addr %s175, 8
      %s177 = scalar_lea.vmem %s2, %s176
      %p178 = scmp.lt.s32.totalorder %s15, 1
      %s179 = scalar_select %p178, %s15, 1
      %s180 = smul.addr %s179, 2
      %s181 = scalar_lea.vmem %s3, %s180
      %v182 = vld [vmem:[%s172] sm:$0xff]
      %v183 = vld [vmem:[%s172 + $0x8] sm:$0xff]
      %vm186 = vcmask 1040384
      %v187 = vrot.slane %v182, 7
      %v188 = vrot.slane %v183, 7
      %v189 = vsel %vm186, %v187, %v188
      %v192 = vsel %vm186, 0.0, %v187
      %vm193 = vcmask 1046528
      %v194 = vrot.slane %v182, 1
      %v195 = vrot.slane %v183, 1
      %v196 = vsel %vm193, %v194, %v195
      %v199 = vsel %vm193, %v195, 0.0
      %v200 = vld [vmem:[%s1] sm:$0xff]
      %v201 = vld [vmem:[%s1 + $0x8] sm:$0xff]
      %v202 = vld [vmem:[%s1 + $0x10] sm:$0xff]
      %v203 = vld [vmem:[%s1 + $0x18] sm:$0xff]
      %v204 = vld [vmem:[%s1 + $0x20] sm:$0xff]
      %v205 = vld [vmem:[%s1 + $0x28] sm:$0xff]
      %v206 = vld [vmem:[%s1 + $0x30] sm:$0xff]
      %v207 = vld [vmem:[%s1 + $0x38] sm:$0xff]
      %v208 = vld [vmem:[%s1 + $0x40] sm:$0xff]
      %v209 = vld [vmem:[%s1 + $0x48] sm:$0xff]
      %v210 = vld [vmem:[%s1 + $0x50] sm:$0xff]
      %v211 = vld [vmem:[%s1 + $0x58] sm:$0xff]
      %v212 = vld [vmem:[%s1 + $0x60] sm:$0xff]
      %v213 = vld [vmem:[%s1 + $0x68] sm:$0xff]
      %v214 = vld [vmem:[%s1 + $0x70] sm:$0xff]
      %v215 = vld [vmem:[%s1 + $0x78] sm:$0xff]
      %v216 = vld [vmem:[%s1 + $0x80] sm:$0xff]
      %v217 = vld [vmem:[%s1 + $0x88] sm:$0xff]
      %v218 = vld [vmem:[%s1 + $0x90] sm:$0xff]
      %v219 = vld [vmem:[%s1 + $0x98] sm:$0xff]
      %v220 = vld [vmem:[%s1 + $0xa0] sm:$0xff]
      %v221 = vld [vmem:[%s1 + $0xa8] sm:$0xff]
      %v222 = vld [vmem:[%s1 + $0xb0] sm:$0xff]
      %v223 = vld [vmem:[%s1 + $0xb8] sm:$0xff]
      %v224 = vld [vmem:[%s1 + $0xc0] sm:$0xff]
      %v225 = vld [vmem:[%s1 + $0xc8] sm:$0xff]
      %v226 = vld [vmem:[%s1 + $0xd0] sm:$0xff]
      %v227 = vld [vmem:[%s1 + $0xd8] sm:$0xff]
      %v228 = vld [vmem:[%s1 + $0xe0] sm:$0xff]
      %v229 = vld [vmem:[%s1 + $0xe8] sm:$0xff]
      %v230 = vld [vmem:[%s1 + $0xf0] sm:$0xff]
      %v231 = vld [vmem:[%s1 + $0xf8] sm:$0xff]
      %v232 = vld [vmem:[%s1 + $0x100] sm:$0xff]
      %v233 = vld [vmem:[%s1 + $0x108] sm:$0xff]
      %v234 = vld [vmem:[%s1 + $0x110] sm:$0xff]
      %v235 = vld [vmem:[%s1 + $0x118] sm:$0xff]
      %v236 = vld [vmem:[%s1 + $0x120] sm:$0xff]
      %v237 = vld [vmem:[%s1 + $0x128] sm:$0xff]
      %v238 = vld [vmem:[%s1 + $0x130] sm:$0xff]
      %v239 = vld [vmem:[%s1 + $0x138] sm:$0xff]
      %v240 = vld [vmem:[%s1 + $0x140] sm:$0xff]
      %v241 = vld [vmem:[%s1 + $0x148] sm:$0xff]
      %v242 = vld [vmem:[%s1 + $0x150] sm:$0xff]
      %v243 = vld [vmem:[%s1 + $0x158] sm:$0xff]
      %v244 = vld [vmem:[%s1 + $0x160] sm:$0xff]
      %v245 = vld [vmem:[%s1 + $0x168] sm:$0xff]
      %v246 = vld [vmem:[%s1 + $0x170] sm:$0xff]
      %v247 = vld [vmem:[%s1 + $0x178] sm:$0xff]
      %248 = vmatprep.subr.mxu0 0.0
      %249 = vmatpush1.msra.mxu0 %v200
      %250 = vmatprep.subr.mxu0 0.0
      %251 = vmatpush1.msra.mxu0 %v201
      %252 = vmatprep.subr.mxu0 0.0
      %253 = vmatpush1.msra.mxu0 %v202
      %254 = vmatprep.subr.mxu0 0.0
      %255 = vmatpush1.msra.mxu0 %v203
      %256 = vmatprep.subr.mxu0 0.0
      %257 = vmatpush1.msra.mxu0 %v204
      %258 = vmatprep.subr.mxu0 0.0
      %259 = vmatpush1.msra.mxu0 %v205
      %260 = vmatprep.subr.mxu0 0.0
      %261 = vmatpush1.msra.mxu0 %v206
      %262 = vmatprep.subr.mxu0 0.0
      %263 = vmatpush1.msra.mxu0 %v207
      %264 = vmatprep.subr.mxu0 0.0
      %265 = vmatpush1.msra.mxu0 %v208
      %266 = vmatprep.subr.mxu0 0.0
      %267 = vmatpush1.msra.mxu0 %v209
      %268 = vmatprep.subr.mxu0 0.0
      %269 = vmatpush1.msra.mxu0 %v210
      %270 = vmatprep.subr.mxu0 0.0
      %271 = vmatpush1.msra.mxu0 %v211
      %272 = vmatprep.subr.mxu0 0.0
      %273 = vmatpush1.msra.mxu0 %v212
      %274 = vmatprep.subr.mxu0 0.0
      %275 = vmatpush1.msra.mxu0 %v213
      %276 = vmatprep.subr.mxu0 0.0
      %277 = vmatpush1.msra.mxu0 %v214
      %278 = vmatprep.subr.mxu0 0.0
      %279 = vmatpush1.msra.mxu0 %v215
      %280 = vmatprep.subr.mxu0 0.0
      %281 = vmatpush1.msra.mxu0 %v216
      %282 = vmatprep.subr.mxu0 0.0
      %283 = vmatpush1.msra.mxu0 %v217
      %284 = vmatprep.subr.mxu0 0.0
      %285 = vmatpush1.msra.mxu0 %v218
      %286 = vmatprep.subr.mxu0 0.0
      %287 = vmatpush1.msra.mxu0 %v219
      %288 = vmatprep.subr.mxu0 0.0
      %289 = vmatpush1.msra.mxu0 %v220
      %290 = vmatprep.subr.mxu0 0.0
      %291 = vmatpush1.msra.mxu0 %v221
      %292 = vmatprep.subr.mxu0 0.0
      %293 = vmatpush1.msra.mxu0 %v222
      %294 = vmatprep.subr.mxu0 0.0
      %295 = vmatpush1.msra.mxu0 %v223
      %296 = vmatprep.subr.mxu0 0.0
      %297 = vmatpush1.msra.mxu0 %v224
      %298 = vmatprep.subr.mxu0 0.0
      %299 = vmatpush1.msra.mxu0 %v225
      %300 = vmatprep.subr.mxu0 0.0
      %301 = vmatpush1.msra.mxu0 %v226
      %302 = vmatprep.subr.mxu0 0.0
      %303 = vmatpush1.msra.mxu0 %v227
      %304 = vmatprep.subr.mxu0 0.0
      %305 = vmatpush1.msra.mxu0 %v228
      %306 = vmatprep.subr.mxu0 0.0
      %307 = vmatpush1.msra.mxu0 %v229
      %308 = vmatprep.subr.mxu0 0.0
      %309 = vmatpush1.msra.mxu0 %v230
      %310 = vmatprep.subr.mxu0 0.0
      %311 = vmatpush1.msra.mxu0 %v231
      %312 = vmatprep.mubr.f32.mxu0 %v182
      %313 = vmatmul.mubr.f32.gmra.mrb[0].mxu0 %v192
      %v314 = vpop.f32.mrb[0].mxu0
      %v315 = vadd.f32 0.0, %v314
      %v316 = vpop.f32.mrb[0].mxu0
      %317 = vmatprep.mubr.f32.mxu0 %v183
      %318 = vmatmul.mubr.f32.gmra.mrb[0].mxu0 %v189
      %v319 = vpop.f32.mrb[0].mxu0
      %v320 = vadd.f32 0.0, %v319
      %v321 = vpop.f32.mrb[0].mxu0
      %322 = vdwg.mxu0
      %323 = vmatprep.subr.mxu0 0.0
      %324 = vmatpush1.msra.mxu0 %v232
      %325 = vmatprep.subr.mxu0 0.0
      %326 = vmatpush1.msra.mxu0 %v233
      %327 = vmatprep.subr.mxu0 0.0
      %328 = vmatpush1.msra.mxu0 %v234
      %329 = vmatprep.subr.mxu0 0.0
      %330 = vmatpush1.msra.mxu0 %v235
      %331 = vmatprep.subr.mxu0 0.0
      %332 = vmatpush1.msra.mxu0 %v236
      %333 = vmatprep.subr.mxu0 0.0
      %334 = vmatpush1.msra.mxu0 %v237
      %335 = vmatprep.subr.mxu0 0.0
      %336 = vmatpush1.msra.mxu0 %v238
      %337 = vmatprep.subr.mxu0 0.0
      %338 = vmatpush1.msra.mxu0 %v239
      %339 = vmatprep.subr.mxu0 0.0
      %340 = vmatpush1.msra.mxu0 %v240
      %341 = vmatprep.subr.mxu0 0.0
      %342 = vmatpush1.msra.mxu0 %v241
      %343 = vmatprep.subr.mxu0 0.0
      %344 = vmatpush1.msra.mxu0 %v242
      %345 = vmatprep.subr.mxu0 0.0
      %346 = vmatpush1.msra.mxu0 %v243
      %347 = vmatprep.subr.mxu0 0.0
      %348 = vmatpush1.msra.mxu0 %v244
      %349 = vmatprep.subr.mxu0 0.0
      %350 = vmatpush1.msra.mxu0 %v245
      %351 = vmatprep.subr.mxu0 0.0
      %352 = vmatpush1.msra.mxu0 %v246
      %353 = vmatprep.subr.mxu0 0.0
      %354 = vmatpush1.msra.mxu0 %v247
      %355 = vmatprep.subr.mxu0 0.0
      %356 = vmatpush1.msra.mxu0 0.0
      %357 = vmatprep.subr.mxu0 0.0
      %358 = vmatpush1.msra.mxu0 0.0
      %359 = vmatprep.subr.mxu0 0.0
      %360 = vmatpush1.msra.mxu0 0.0
      %361 = vmatprep.subr.mxu0 0.0
      %362 = vmatpush1.msra.mxu0 0.0
      %363 = vmatprep.subr.mxu0 0.0
      %364 = vmatpush1.msra.mxu0 0.0
      %365 = vmatprep.subr.mxu0 0.0
      %366 = vmatpush1.msra.mxu0 0.0
      %367 = vmatprep.subr.mxu0 0.0
      %368 = vmatpush1.msra.mxu0 0.0
      %369 = vmatprep.subr.mxu0 0.0
      %370 = vmatpush1.msra.mxu0 0.0
      %371 = vmatprep.subr.mxu0 0.0
      %372 = vmatpush1.msra.mxu0 0.0
      %373 = vmatprep.subr.mxu0 0.0
      %374 = vmatpush1.msra.mxu0 0.0
      %375 = vmatprep.subr.mxu0 0.0
      %376 = vmatpush1.msra.mxu0 0.0
      %377 = vmatprep.subr.mxu0 0.0
      %378 = vmatpush1.msra.mxu0 0.0
      %379 = vmatprep.subr.mxu0 0.0
      %380 = vmatpush1.msra.mxu0 0.0
      %381 = vmatprep.subr.mxu0 0.0
      %382 = vmatpush1.msra.mxu0 0.0
      %383 = vmatprep.subr.mxu0 0.0
      %384 = vmatpush1.msra.mxu0 0.0
      %385 = vmatprep.subr.mxu0 0.0
      %386 = vmatpush1.msra.mxu0 0.0
      %387 = vmatprep.mubr.f32.mxu0 0.0
      %388 = vmatmul.mubr.f32.gmra.mrb[0].mxu0 %v196
      %v389 = vpop.f32.mrb[0].mxu0
      %v390 = vadd.f32 %v315, %v389
      %v391 = vpop.f32.mrb[0].mxu0
      %392 = vmatprep.mubr.f32.mxu0 0.0
      %393 = vmatmul.mubr.f32.gmra.mrb[0].mxu0 %v199
      %v394 = vpop.f32.mrb[0].mxu0
      %v395 = vadd.f32 %v320, %v394
      %v396 = vpop.f32.mrb[0].mxu0
      %397 = vdwg.mxu0
      %398 = vst [vmem:[%s177] sm:$0xff] %v390
      %399 = vst [vmem:[%s177 + $0x8] sm:$0xff] %v395
      %v400 = vadd.f32 %v390, %v395
      %v401 = vrot.slane %v400, 4
      %v402 = vadd.f32 %v400, %v401
      %v403 = vrot.slane %v402, 2
      %v404 = vadd.f32 %v402, %v403
      %v405 = vrot.slane %v404, 1
      %v406 = vadd.f32 %v404, %v405
      %v407 = vmul.f32 %v390, %v390
      %v408 = vmul.f32 %v395, %v395
      %v409 = vadd.f32 %v407, %v408
      %v410 = vrot.slane %v409, 4
      %v411 = vadd.f32 %v409, %v410
      %v412 = vrot.slane %v411, 2
      %v413 = vadd.f32 %v411, %v412
      %v414 = vrot.slane %v413, 1
      %v415 = vadd.f32 %v413, %v414
      %v416 = vsel %vm186, %v406, %v415
      %417 = vst [vmem:[%s181] sm:$0x3] %v416
      %p418 = scmp.lt.s32.totalorder %s15, 1
      %s419 = scalar_select %p418, %s15, 1
      %s420 = smul.addr %s419, 2
      %s421 = smul.addr %s420, 8
      %s422 = scalar_lea.vmem %s2, %s421
      %p423 = scmp.lt.s32.totalorder %s15, 1
      %s424 = scalar_select %p423, %s15, 1
      %s425 = smul.addr %s424, 2
      %s426 = scalar_lea.vmem %s3, %s425
      // Predicated region
      $region29: #{residue_block.3} parent=27 // pred_check
        %p427 = pneg %p80
      $region30: #{residue_block.3} parent=27 // pred_check_branch
        %429 = sbr.rel (%p427) target = $region32
      $region31: #{residue_block.3} parent=27 // pred_region
        _
      $region32: #{residue_block.3} parent=27 // pred_fallthru
        _
      // Predicated region
      $region33: #{residue_block.3} parent=27 // pred_check
        %p430 = pneg %p106
      $region34: #{residue_block.3} parent=27 // pred_check_branch
        %432 = sbr.rel (%p430) target = $region36
      $region35: #{residue_block.3} parent=27 // pred_region
        _
      $region36: #{residue_block.3} parent=27 // pred_fallthru
        _
    $region28: #{residue_block.3} parent=5 // pred_fallthru
      _
    %p433 = scmp.le.s32.totalorder 2, %s10
    // Predicated region
    $region37: #{residue_block.3} parent=5 // pred_check
      %p434 = pneg %p433
    $region38: #{residue_block.3} parent=5 // pred_check_branch
      %436 = sbr.rel (%p434) target = $region40
    $region39: #{residue_block.3} parent=5 // pred_region
      %s437 = ssub.s32 %s10, 2
      // Predicated region
      $region41: #{residue_block.3} parent=39 // pred_check
        %p438 = pneg %p86
      $region42: #{residue_block.3} parent=39 // pred_check_branch
        %440 = sbr.rel (%p438) target = $region44
      $region43: #{residue_block.3} parent=39 // pred_region
        %p441 = scmp.lt.s32.totalorder %s16, 1
        %s442 = scalar_select %p441, %s16, 1
        %s443 = smul.addr %s442, 2
        %s444 = smul.addr %s443, 8
        %s445 = scalar_lea.vmem %s2, %s444
      $region44: #{residue_block.3} parent=39 // pred_fallthru
        _
      // Predicated region
      $region45: #{residue_block.3} parent=39 // pred_check
        %p446 = pneg %p112
      $region46: #{residue_block.3} parent=39 // pred_check_branch
        %448 = sbr.rel (%p446) target = $region48
      $region47: #{residue_block.3} parent=39 // pred_region
        %p449 = scmp.lt.s32.totalorder %s16, 1
        %s450 = scalar_select %p449, %s16, 1
        %s451 = smul.addr %s450, 2
        %s452 = scalar_lea.vmem %s3, %s451
      $region48: #{residue_block.3} parent=39 // pred_fallthru
        _
    $region40: #{residue_block.3} parent=5 // pred_fallthru
      _
  $region6: #{residue_block.3} parent=0 // loop_footer
    %s14 = sadd.s32 1, %s10
  $region7: #{residue_block.3} parent=0 // loop_footer_branch
    %9 = sbr.rel target = $region3
  $region8: #{residue_block.3} parent=0 // loop_exit
    _

// kernel: tile.23
$region0: #{tile.23}
  #allocation0 [shape = 's32[1]{0}', space=sflag, size = 0x4, scoped, tag = 'scoped memory for tile.23']
  %s0 = inlined_call_operand.vmem [shape: f32[8], index: 0, kind: input, shape index: {}]
  %s1 = inlined_call_operand.vmem [shape: f32[16,8], index: 1, kind: output, shape index: {}]
  // Predicated region
  $region2: #{tile.23} parent=0 // pred_check
    _
  $region3: #{tile.23} parent=0 // pred_check_branch
    %3 = sbr.rel (0) target = $region5
  $region4: #{tile.23} parent=0 // pred_region
    _
  $region5: #{tile.23} parent=0 // pred_fallthru
    _
  %v4 = vld [vmem:[%s0] ss:$0 sm:$0xff]
  %5 = vst [vmem:[%s1] sm:$0xff] %v4
  %s6 = scalar_lea.vmem %s1, 8
  %7 = vst [vmem:[%s6] sm:$0xff] %v4

// kernel: tile.28
$region0: #{tile.28}
  %s0 = inlined_call_operand.vmem [shape: f32[16,8], index: 0, kind: input, shape index: {}]
  %s1 = inlined_call_operand.vmem [shape: f32[1,128], index: 1, kind: output, shape index: {}]
  $region1: #{tile.28} parent=0
    #allocation0 [shape = 'u8[4096]{0}', space=vmem, size = 0x1000, scoped, tag = 'scoped mem for output reshape']
    %v2 = vld [vmem:[%s0] sm:$0x1]
    %vm3 = vcmask 64512
    %4 = vst.msk [vmem:[#allocation0] sm:$0x1] %vm3, %v2
    %s5 = scalar_lea.vmem %s0, 15
    %v6 = vld [vmem:[%s5] sm:$0x1]
    %7 = vrot.lane.b32.xlu0 %v6, 120
    %v8 = vpop.permute.xlu0 %7
    %vm9 = vcmask 1048512
    %10 = vst.msk [vmem:[#allocation0] sm:$0x1] %vm9, %v8
    %s11 = scalar_lea.vmem %s0, 14
    %v12 = vld [vmem:[%s11] sm:$0x1]
    %13 = vrot.lane.b32.xlu0 %v12, 112
    %v14 = vpop.permute.xlu0 %13
    %vm15 = vcmask 982912
    %16 = vst.msk [vmem:[#allocation0] sm:$0x1] %vm15, %v14
    %s17 = scalar_lea.vmem %s0, 13
    %v18 = vld [vmem:[%s17] sm:$0x1]
    %19 = vrot.lane.b32.xlu0 %v18, 104
    %v20 = vpop.permute.xlu0 %19
    %vm21 = vcmask 917312
    %22 = vst.msk [vmem:[#allocation0] sm:$0x1] %vm21, %v20
    %s23 = scalar_lea.vmem %s0, 12
    %v24 = vld [vmem:[%s23] sm:$0x1]
    %25 = vrot.lane.b32.xlu0 %v24, 96
    %v26 = vpop.permute.xlu0 %25
    %vm27 = vcmask 851712
    %28 = vst.msk [vmem:[#allocation0] sm:$0x1] %vm27, %v26
    %s29 = scalar_lea.vmem %s0, 11
    %v30 = vld [vmem:[%s29] sm:$0x1]
    %31 = vrot.lane.b32.xlu0 %v30, 88
    %v32 = vpop.permute.xlu0 %31
    %vm33 = vcmask 786112
    %34 = vst.msk [vmem:[#allocation0] sm:$0x1] %vm33, %v32
    %s35 = scalar_lea.vmem %s0, 10
    %v36 = vld [vmem:[%s35] sm:$0x1]
    %37 = vrot.lane.b32.xlu0 %v36, 80
    %v38 = vpop.permute.xlu0 %37
    %vm39 = vcmask 720512
    %40 = vst.msk [vmem:[#allocation0] sm:$0x1] %vm39, %v38
    %s41 = scalar_lea.vmem %s0, 9
    %v42 = vld [vmem:[%s41] sm:$0x1]
    %43 = vrot.lane.b32.xlu0 %v42, 72
    %v44 = vpop.permute.xlu0 %43
    %vm45 = vcmask 654912
    %46 = vst.msk [vmem:[#allocation0] sm:$0x1] %vm45, %v44
    %s47 = scalar_lea.vmem %s0, 8
    %v48 = vld [vmem:[%s47] sm:$0x1]
    %49 = vrot.lane.b32.xlu0 %v48, 64
    %v50 = vpop.permute.xlu0 %49
    %vm51 = vcmask 589312
    %52 = vst.msk [vmem:[#allocation0] sm:$0x1] %vm51, %v50
    %s53 = scalar_lea.vmem %s0, 7
    %v54 = vld [vmem:[%s53] sm:$0x1]
    %55 = vrot.lane.b32.xlu0 %v54, 56
    %v56 = vpop.permute.xlu0 %55
    %vm57 = vcmask 523712
    %58 = vst.msk [vmem:[#allocation0] sm:$0x1] %vm57, %v56
    %s59 = scalar_lea.vmem %s0, 6
    %v60 = vld [vmem:[%s59] sm:$0x1]
    %61 = vrot.lane.b32.xlu0 %v60, 48
    %v62 = vpop.permute.xlu0 %61
    %vm63 = vcmask 458112
    %64 = vst.msk [vmem:[#allocation0] sm:$0x1] %vm63, %v62
    %s65 = scalar_lea.vmem %s0, 5
    %v66 = vld [vmem:[%s65] sm:$0x1]
    %67 = vrot.lane.b32.xlu0 %v66, 40
    %v68 = vpop.permute.xlu0 %67
    %vm69 = vcmask 392512
    %70 = vst.msk [vmem:[#allocation0] sm:$0x1] %vm69, %v68
    %s71 = scalar_lea.vmem %s0, 4
    %v72 = vld [vmem:[%s71] sm:$0x1]
    %73 = vrot.lane.b32.xlu0 %v72, 32
    %v74 = vpop.permute.xlu0 %73
    %vm75 = vcmask 326912
    %76 = vst.msk [vmem:[#allocation0] sm:$0x1] %vm75, %v74
    %s77 = scalar_lea.vmem %s0, 3
    %v78 = vld [vmem:[%s77] sm:$0x1]
    %79 = vrot.lane.b32.xlu0 %v78, 24
    %v80 = vpop.permute.xlu0 %79
    %vm81 = vcmask 261312
    %82 = vst.msk [vmem:[#allocation0] sm:$0x1] %vm81, %v80
    %s83 = scalar_lea.vmem %s0, 2
    %v84 = vld [vmem:[%s83] sm:$0x1]
    %85 = vrot.lane.b32.xlu0 %v84, 16
    %v86 = vpop.permute.xlu0 %85
    %vm87 = vcmask 195712
    %88 = vst.msk [vmem:[#allocation0] sm:$0x1] %vm87, %v86
    %s89 = scalar_lea.vmem %s0, 1
    %v90 = vld [vmem:[%s89] sm:$0x1]
    %91 = vrot.lane.b32.xlu0 %v90, 8
    %v92 = vpop.permute.xlu0 %91
    %vm93 = vcmask 130112
    %94 = vst.msk [vmem:[#allocation0] sm:$0x1] %vm93, %v92
    %s96 = sshllo.u32 0, 1
    %v98 = vld [vmem:[#allocation0] sm:%s96]
    %s99 = sshllo.u32 0, 1
    %100 = vst [vmem:[%s1] sm:%s99] %v98

// kernel: residue_block.5
$region0: #{residue_block.5}
  #allocation0 [shape = 'u32[]', space=smem, size = 0x4, offset = 0x4, fixed_abs, tag = 'smem constant byte address 0x4 - core index']
  #allocation1 [shape = 'u32[144,128]{1,0:T(1,128)}', space=vmem, size = 0x12000, scoped, tag = 'internal scratch']
  %s0 = inlined_call_operand.vmem [shape: f32[2,16,128], index: 0, kind: input, shape index: {}]
  %s1 = inlined_call_operand.vmem [shape: f32[2,16,128], index: 1, kind: input, shape index: {}]
  %s2 = inlined_call_operand.vmem [shape: f32[1,128], index: 2, kind: input, shape index: {}]
  %s3 = inlined_call_operand.vmem [shape: f32[1,128], index: 3, kind: input, shape index: {}]
  %s4 = inlined_call_operand.vmem [shape: f32[2,16,128], index: 4, kind: output, shape index: {}]
  %s5 = sld [smem:[#allocation0]]
  $region49: #{residue_block.5} parent=0
    _
  %s7 = ssub.s32 1, %s5
  %s8 = scalar_select 0, %s7, %s5
  loop: start=0, step=1, limit=4
  $region2: #{residue_block.5} parent=0 // loop_pre_header
    _
  $region3: #{residue_block.5} parent=0 // loop_header
    %s10 = sphi 0, %s14
    %p11 = scmp.ge.s32.totalorder %s10, 4
    %s20 = sphi 0, %s22
    %s23 = sphi 0, %s20
    %s24 = sphi 0, %s23
    %s40 = sphi 0, %s24
    %s46 = sphi 0, %s48
    %s49 = sphi 0, %s46
    %s50 = sphi 0, %s49
    %s66 = sphi 0, %s50
    %s70 = sphi 0, %s70
    %s72 = sphi 0, %s70
    %s73 = sphi 0, %s72
    %s87 = sphi 0, %s73
    %s91 = sphi 0, %s91
    %s93 = sphi 0, %s91
    %s94 = sphi 0, %s93
    %s108 = sphi 0, %s94
    %s114 = sphi 0, %s116
    %s117 = sphi 0, %s114
    %s118 = sphi 0, %s117
    %s134 = sphi 0, %s118
  $region4: #{residue_block.5} parent=0 // loop_header_branch
    %13 = sbr.rel (%p11) target = $region8
  $region5: #{residue_block.5} parent=0 // loop_body
    %s15 = ssub.s32 %s10, 1
    %s16 = ssub.s32 %s10, 2
    %s17 = sadd.s32 %s10, 1
    %s18 = ssub.s32 %s10, %s17
    %p19 = scmp.eq.s32.totalorder %s18, 0
    %s21 = sadd.s32 %s20, 1
    %s22 = scalar_select %p19, %s20, %s21
    %p25 = pneg %p19
    %p26 = scmp.eq.s32.totalorder %s10, 1
    %p27 = por %p25, %p26
    %p28 = scmp.ne.s32.totalorder %s20, %s23
    %p29 = scmp.eq.s32.totalorder %s10, 0
    %p30 = por %p28, %p29
    %p31 = scmp.ne.s32.totalorder %s20, %s23
    %p32 = scmp.eq.s32.totalorder %s15, 1
    %p33 = por %p31, %p32
    %p34 = scmp.ne.s32.totalorder %s23, %s24
    %p35 = scmp.eq.s32.totalorder %s15, 0
    %p36 = por %p34, %p35
    %p37 = scmp.ne.s32.totalorder %s23, %s24
    %p38 = scmp.eq.s32.totalorder %s16, 1
    %p39 = por %p37, %p38
    %p41 = scmp.ne.s32.totalorder %s24, %s40
    %p42 = scmp.eq.s32.totalorder %s16, 0
    %p43 = por %p41, %p42
    %s44 = ssub.s32 %s10, %s17
    %p45 = scmp.eq.s32.totalorder %s44, 0
    %s47 = sadd.s32 %s46, 1
    %s48 = scalar_select %p45, %s46, %s47
    %p51 = pneg %p45
    %p52 = scmp.eq.s32.totalorder %s10, 1
    %p53 = por %p51, %p52
    %p54 = scmp.ne.s32.totalorder %s46, %s49
    %p55 = scmp.eq.s32.totalorder %s10, 0
    %p56 = por %p54, %p55
    %p57 = scmp.ne.s32.totalorder %s46, %s49
    %p58 = scmp.eq.s32.totalorder %s15, 1
    %p59 = por %p57, %p58
    %p60 = scmp.ne.s32.totalorder %s49, %s50
    %p61 = scmp.eq.s32.totalorder %s15, 0
    %p62 = por %p60, %p61
    %p63 = scmp.ne.s32.totalorder %s49, %s50
    %p64 = scmp.eq.s32.totalorder %s16, 1
    %p65 = por %p63, %p64
    %p67 = scmp.ne.s32.totalorder %s50, %s66
    %p68 = scmp.eq.s32.totalorder %s16, 0
    %p69 = por %p67, %p68
    %s71 = sadd.s32 %s70, 1
    %p74 = scmp.eq.s32.totalorder %s10, 1
    %p75 = scmp.ne.s32.totalorder %s70, %s72
    %p76 = scmp.eq.s32.totalorder %s10, 0
    %p77 = por %p75, %p76
    %p78 = scmp.ne.s32.totalorder %s70, %s72
    %p79 = scmp.eq.s32.totalorder %s15, 1
    %p80 = por %p78, %p79
    %p81 = scmp.ne.s32.totalorder %s72, %s73
    %p82 = scmp.eq.s32.totalorder %s15, 0
    %p83 = por %p81, %p82
    %p84 = scmp.ne.s32.totalorder %s72, %s73
    %p85 = scmp.eq.s32.totalorder %s16, 1
    %p86 = por %p84, %p85
    %p88 = scmp.ne.s32.totalorder %s73, %s87
    %p89 = scmp.eq.s32.totalorder %s16, 0
    %p90 = por %p88, %p89
    %s92 = sadd.s32 %s91, 1
    %p95 = scmp.eq.s32.totalorder %s10, 1
    %p96 = scmp.ne.s32.totalorder %s91, %s93
    %p97 = scmp.eq.s32.totalorder %s10, 0
    %p98 = por %p96, %p97
    %p99 = scmp.ne.s32.totalorder %s91, %s93
    %p100 = scmp.eq.s32.totalorder %s15, 1
    %p101 = por %p99, %p100
    %p102 = scmp.ne.s32.totalorder %s93, %s94
    %p103 = scmp.eq.s32.totalorder %s15, 0
    %p104 = por %p102, %p103
    %p105 = scmp.ne.s32.totalorder %s93, %s94
    %p106 = scmp.eq.s32.totalorder %s16, 1
    %p107 = por %p105, %p106
    %p109 = scmp.ne.s32.totalorder %s94, %s108
    %p110 = scmp.eq.s32.totalorder %s16, 0
    %p111 = por %p109, %p110
    %s112 = ssub.s32 %s10, %s17
    %p113 = scmp.eq.s32.totalorder %s112, 0
    %s115 = sadd.s32 %s114, 1
    %s116 = scalar_select %p113, %s114, %s115
    %p119 = pneg %p113
    %p120 = scmp.eq.s32.totalorder %s10, 1
    %p121 = por %p119, %p120
    %p122 = scmp.ne.s32.totalorder %s114, %s117
    %p123 = scmp.eq.s32.totalorder %s10, 0
    %p124 = por %p122, %p123
    %p125 = scmp.ne.s32.totalorder %s114, %s117
    %p126 = scmp.eq.s32.totalorder %s15, 1
    %p127 = por %p125, %p126
    %p128 = scmp.ne.s32.totalorder %s117, %s118
    %p129 = scmp.eq.s32.totalorder %s15, 0
    %p130 = por %p128, %p129
    %p131 = scmp.ne.s32.totalorder %s117, %s118
    %p132 = scmp.eq.s32.totalorder %s16, 1
    %p133 = por %p131, %p132
    %p135 = scmp.ne.s32.totalorder %s118, %s134
    %p136 = scmp.eq.s32.totalorder %s16, 0
    %p137 = por %p135, %p136
    %p138 = scmp.le.s32.totalorder 1, %s10
    %p139 = scmp.lt.s32.totalorder %s10, 3
    %p140 = pnand %p138, %p139
    %p141 = pneg %p140
    // Predicated region
    $region9: #{residue_block.5} parent=5 // pred_check
      _
    $region10: #{residue_block.5} parent=5 // pred_check_branch
      %143 = sbr.rel (%p140) target = $region12
    $region11: #{residue_block.5} parent=5 // pred_region
      %s144 = ssub.s32 %s10, 1
      // Predicated region
      $region13: #{residue_block.5} parent=11 // pred_check
        %p145 = pneg %p83
      $region14: #{residue_block.5} parent=11 // pred_check_branch
        %147 = sbr.rel (%p145) target = $region16
      $region15: #{residue_block.5} parent=11 // pred_region
        _
      $region16: #{residue_block.5} parent=11 // pred_fallthru
        _
      // Predicated region
      $region17: #{residue_block.5} parent=11 // pred_check
        %p148 = pneg %p104
      $region18: #{residue_block.5} parent=11 // pred_check_branch
        %150 = sbr.rel (%p148) target = $region20
      $region19: #{residue_block.5} parent=11 // pred_region
        _
      $region20: #{residue_block.5} parent=11 // pred_fallthru
        _
    $region12: #{residue_block.5} parent=5 // pred_fallthru
      _
    %p151 = scmp.lt.s32.totalorder %s10, 2
    // Predicated region
    $region21: #{residue_block.5} parent=5 // pred_check
      %p152 = pneg %p151
    $region22: #{residue_block.5} parent=5 // pred_check_branch
      %154 = sbr.rel (%p152) target = $region24
    $region23: #{residue_block.5} parent=5 // pred_region
      // Predicated region
      $region25: #{residue_block.5} parent=23 // pred_check
        %p155 = pneg %p30
      $region26: #{residue_block.5} parent=23 // pred_check_branch
        %157 = sbr.rel (%p155) target = $region28
      $region27: #{residue_block.5} parent=23 // pred_region
        %p158 = scmp.lt.s32.totalorder %s10, 1
        %s159 = scalar_select %p158, %s10, 1
        %s160 = smul.addr %s159, 2
        %s161 = smul.addr %s160, 8
        %s162 = scalar_lea.vmem %s0, %s161
      $region28: #{residue_block.5} parent=23 // pred_fallthru
        _
      // Predicated region
      $region29: #{residue_block.5} parent=23 // pred_check
        %p163 = pneg %p56
      $region30: #{residue_block.5} parent=23 // pred_check_branch
        %165 = sbr.rel (%p163) target = $region32
      $region31: #{residue_block.5} parent=23 // pred_region
        %p166 = scmp.lt.s32.totalorder %s10, 1
        %s167 = scalar_select %p166, %s10, 1
        %s168 = smul.addr %s167, 2
        %s169 = smul.addr %s168, 8
        %s170 = scalar_lea.vmem %s1, %s169
      $region32: #{residue_block.5} parent=23 // pred_fallthru
        _
    $region24: #{residue_block.5} parent=5 // pred_fallthru
      _
    %p171 = scmp.le.s32.totalorder 1, %s10
    %p172 = scmp.lt.s32.totalorder %s10, 3
    %p173 = pnand %p171, %p172
    %p174 = pneg %p173
    // Predicated region
    $region33: #{residue_block.5} parent=5 // pred_check
      _
    $region34: #{residue_block.5} parent=5 // pred_check_branch
      %176 = sbr.rel (%p173) target = $region36
    $region35: #{residue_block.5} parent=5 // pred_region
      %s177 = ssub.s32 %s10, 1
      %p178 = scmp.lt.s32.totalorder %s15, 1
      %s179 = scalar_select %p178, %s15, 1
      %s180 = smul.addr %s179, 2
      %s181 = smul.addr %s180, 8
      %s182 = scalar_lea.vmem %s0, %s181
      %p183 = pneg %p36
      %p184 = pneg %p33
      %p185 = scmp.lt.s32.totalorder %s15, 1
      %s186 = scalar_select %p185, %s15, 1
      %s187 = smul.addr %s186, 2
      %s188 = smul.addr %s187, 8
      %s189 = scalar_lea.vmem %s1, %s188
      %p190 = pneg %p62
      %p191 = pneg %p59
      %p192 = pneg %p83
      %p193 = pneg %p80
      %p194 = pneg %p104
      %p195 = pneg %p101
      %p196 = pneg %p130
      %p197 = pneg %p127
      %p198 = scmp.lt.s32.totalorder %s15, 1
      %s199 = scalar_select %p198, %s15, 1
      %s200 = smul.addr %s199, 2
      %s201 = smul.addr %s200, 8
      %s202 = scalar_lea.vmem %s4, %s201
      %p203 = scmp.lt.s32.totalorder %s15, 1
      %s204 = scalar_select %p203, %s15, 1
      %s205 = smul.addr %s204, 2
      %s206 = smul.addr %s205, 8
      %s207 = scalar_lea.vmem %s0, %s206
      %p208 = scmp.lt.s32.totalorder %s15, 1
      %s209 = scalar_select %p208, %s15, 1
      %s210 = smul.addr %s209, 2
      %s211 = smul.addr %s210, 8
      %s212 = scalar_lea.vmem %s1, %s211
      %p213 = scmp.lt.s32.totalorder %s15, 1
      %s214 = scalar_select %p213, %s15, 1
      %s215 = smul.addr %s214, 2
      %s216 = smul.addr %s215, 8
      %s217 = scalar_lea.vmem %s4, %s216
      %v218 = vld [vmem:[%s207] sm:$0xff]
      %v219 = vld [vmem:[%s207 + $0x8] sm:$0xff]
      %v220 = vld [vmem:[%s2] sm:$0x1]
      %v222 = vlaneseq
      %v223 = vshrl.u32 %v222, 7
      %v224 = vsub.s32 0, %v223
      %v225 = vrot.slane %v220, %v224
      %v227 = vmul.f32 %v218, %v225
      %v228 = vmul.f32 %v219, %v225
      %v229 = vld [vmem:[%s3] sm:$0x1]
      %v231 = vlaneseq
      %v232 = vshrl.u32 %v231, 7
      %v233 = vsub.s32 0, %v232
      %v234 = vrot.slane %v229, %v233
      %v236 = vadd.f32 %v227, %v234
      %v237 = vadd.f32 %v228, %v234
      %v238 = vld [vmem:[%s212] sm:$0xff]
      %v239 = vld [vmem:[%s212 + $0x8] sm:$0xff]
      %v240 = vadd.f32 %v236, %v238
      %v241 = vadd.f32 %v237, %v239
      %v242 = vmax.f32 %v240, 0.0
      %v243 = vmax.f32 %v241, 0.0
      %244 = vst [vmem:[%s217] sm:$0xff] %v242
      %245 = vst [vmem:[%s217 + $0x8] sm:$0xff] %v243
      %p246 = scmp.lt.s32.totalorder %s15, 1
      %s247 = scalar_select %p246, %s15, 1
      %s248 = smul.addr %s247, 2
      %s249 = smul.addr %s248, 8
      %s250 = scalar_lea.vmem %s4, %s249
      // Predicated region
      $region37: #{residue_block.5} parent=35 // pred_check
        %p251 = pneg %p127
      $region38: #{residue_block.5} parent=35 // pred_check_branch
        %253 = sbr.rel (%p251) target = $region40
      $region39: #{residue_block.5} parent=35 // pred_region
        _
      $region40: #{residue_block.5} parent=35 // pred_fallthru
        _
    $region36: #{residue_block.5} parent=5 // pred_fallthru
      _
    %p254 = scmp.le.s32.totalorder 2, %s10
    // Predicated region
    $region41: #{residue_block.5} parent=5 // pred_check
      %p255 = pneg %p254
    $region42: #{residue_block.5} parent=5 // pred_check_branch
      %257 = sbr.rel (%p255) target = $region44
    $region43: #{residue_block.5} parent=5 // pred_region
      %s258 = ssub.s32 %s10, 2
      // Predicated region
      $region45: #{residue_block.5} parent=43 // pred_check
        %p259 = pneg %p133
      $region46: #{residue_block.5} parent=43 // pred_check_branch
        %261 = sbr.rel (%p259) target = $region48
      $region47: #{residue_block.5} parent=43 // pred_region
        %p262 = scmp.lt.s32.totalorder %s16, 1
        %s263 = scalar_select %p262, %s16, 1
        %s264 = smul.addr %s263, 2
        %s265 = smul.addr %s264, 8
        %s266 = scalar_lea.vmem %s4, %s265
      $region48: #{residue_block.5} parent=43 // pred_fallthru
        _
    $region44: #{residue_block.5} parent=5 // pred_fallthru
      _
  $region6: #{residue_block.5} parent=0 // loop_footer
    %s14 = sadd.s32 1, %s10
  $region7: #{residue_block.5} parent=0 // loop_footer_branch
    %9 = sbr.rel target = $region3
  $region8: #{residue_block.5} parent=0 // loop_exit
    _

// kernel: residue_block.4
$region0: #{residue_block.4}
  #allocation0 [shape = 'u32[]', space=smem, size = 0x4, offset = 0x4, fixed_abs, tag = 'smem constant byte address 0x4 - core index']
  #allocation1 [shape = 'u32[144,128]{1,0:T(1,128)}', space=vmem, size = 0x12000, scoped, tag = 'internal scratch']
  %s0 = inlined_call_operand.vmem [shape: f32[2,16,128], index: 0, kind: input, shape index: {}]
  %s1 = inlined_call_operand.vmem [shape: f32[1,128], index: 1, kind: input, shape index: {}]
  %s2 = inlined_call_operand.vmem [shape: f32[1,128], index: 2, kind: input, shape index: {}]
  %s3 = inlined_call_operand.vmem [shape: f32[384,128], index: 3, kind: input, shape index: {}]
  %s4 = inlined_call_operand.vmem [shape: f32[2,16,128], index: 4, kind: output, shape index: {0}]
  %s5 = inlined_call_operand.vmem [shape: f32[2,2,128], index: 5, kind: output, shape index: {1}]
  %6 = xla_tuple %s4, %s5
  %s7 = sld [smem:[#allocation0]]
  $region57: #{residue_block.4} parent=0
    _
  %s9 = ssub.s32 1, %s7
  %s10 = scalar_select 0, %s9, %s7
  loop: start=0, step=1, limit=4
  $region2: #{residue_block.4} parent=0 // loop_pre_header
    _
  $region3: #{residue_block.4} parent=0 // loop_header
    %s12 = sphi 0, %s16
    %p13 = scmp.ge.s32.totalorder %s12, 4
    %s22 = sphi 0, %s24
    %s25 = sphi 0, %s22
    %s26 = sphi 0, %s25
    %s42 = sphi 0, %s26
    %s46 = sphi 0, %s46
    %s48 = sphi 0, %s46
    %s49 = sphi 0, %s48
    %s63 = sphi 0, %s49
    %s67 = sphi 0, %s67
    %s69 = sphi 0, %s67
    %s70 = sphi 0, %s69
    %s84 = sphi 0, %s70
    %s88 = sphi 0, %s88
    %s90 = sphi 0, %s88
    %s91 = sphi 0, %s90
    %s105 = sphi 0, %s91
    %s111 = sphi 0, %s113
    %s114 = sphi 0, %s111
    %s115 = sphi 0, %s114
    %s131 = sphi 0, %s115
    %s137 = sphi 0, %s139
    %s140 = sphi 0, %s137
    %s141 = sphi 0, %s140
    %s157 = sphi 0, %s141
  $region4: #{residue_block.4} parent=0 // loop_header_branch
    %15 = sbr.rel (%p13) target = $region8
  $region5: #{residue_block.4} parent=0 // loop_body
    %s17 = ssub.s32 %s12, 1
    %s18 = ssub.s32 %s12, 2
    %s19 = sadd.s32 %s12, 1
    %s20 = ssub.s32 %s12, %s19
    %p21 = scmp.eq.s32.totalorder %s20, 0
    %s23 = sadd.s32 %s22, 1
    %s24 = scalar_select %p21, %s22, %s23
    %p27 = pneg %p21
    %p28 = scmp.eq.s32.totalorder %s12, 1
    %p29 = por %p27, %p28
    %p30 = scmp.ne.s32.totalorder %s22, %s25
    %p31 = scmp.eq.s32.totalorder %s12, 0
    %p32 = por %p30, %p31
    %p33 = scmp.ne.s32.totalorder %s22, %s25
    %p34 = scmp.eq.s32.totalorder %s17, 1
    %p35 = por %p33, %p34
    %p36 = scmp.ne.s32.totalorder %s25, %s26
    %p37 = scmp.eq.s32.totalorder %s17, 0
    %p38 = por %p36, %p37
    %p39 = scmp.ne.s32.totalorder %s25, %s26
    %p40 = scmp.eq.s32.totalorder %s18, 1
    %p41 = por %p39, %p40
    %p43 = scmp.ne.s32.totalorder %s26, %s42
    %p44 = scmp.eq.s32.totalorder %s18, 0
    %p45 = por %p43, %p44
    %s47 = sadd.s32 %s46, 1
    %p50 = scmp.eq.s32.totalorder %s12, 1
    %p51 = scmp.ne.s32.totalorder %s46, %s48
    %p52 = scmp.eq.s32.totalorder %s12, 0
    %p53 = por %p51, %p52
    %p54 = scmp.ne.s32.totalorder %s46, %s48
    %p55 = scmp.eq.s32.totalorder %s17, 1
    %p56 = por %p54, %p55
    %p57 = scmp.ne.s32.totalorder %s48, %s49
    %p58 = scmp.eq.s32.totalorder %s17, 0
    %p59 = por %p57, %p58
    %p60 = scmp.ne.s32.totalorder %s48, %s49
    %p61 = scmp.eq.s32.totalorder %s18, 1
    %p62 = por %p60, %p61
    %p64 = scmp.ne.s32.totalorder %s49, %s63
    %p65 = scmp.eq.s32.totalorder %s18, 0
    %p66 = por %p64, %p65
    %s68 = sadd.s32 %s67, 1
    %p71 = scmp.eq.s32.totalorder %s12, 1
    %p72 = scmp.ne.s32.totalorder %s67, %s69
    %p73 = scmp.eq.s32.totalorder %s12, 0
    %p74 = por %p72, %p73
    %p75 = scmp.ne.s32.totalorder %s67, %s69
    %p76 = scmp.eq.s32.totalorder %s17, 1
    %p77 = por %p75, %p76
    %p78 = scmp.ne.s32.totalorder %s69, %s70
    %p79 = scmp.eq.s32.totalorder %s17, 0
    %p80 = por %p78, %p79
    %p81 = scmp.ne.s32.totalorder %s69, %s70
    %p82 = scmp.eq.s32.totalorder %s18, 1
    %p83 = por %p81, %p82
    %p85 = scmp.ne.s32.totalorder %s70, %s84
    %p86 = scmp.eq.s32.totalorder %s18, 0
    %p87 = por %p85, %p86
    %s89 = sadd.s32 %s88, 1
    %p92 = scmp.eq.s32.totalorder %s12, 1
    %p93 = scmp.ne.s32.totalorder %s88, %s90
    %p94 = scmp.eq.s32.totalorder %s12, 0
    %p95 = por %p93, %p94
    %p96 = scmp.ne.s32.totalorder %s88, %s90
    %p97 = scmp.eq.s32.totalorder %s17, 1
    %p98 = por %p96, %p97
    %p99 = scmp.ne.s32.totalorder %s90, %s91
    %p100 = scmp.eq.s32.totalorder %s17, 0
    %p101 = por %p99, %p100
    %p102 = scmp.ne.s32.totalorder %s90, %s91
    %p103 = scmp.eq.s32.totalorder %s18, 1
    %p104 = por %p102, %p103
    %p106 = scmp.ne.s32.totalorder %s91, %s105
    %p107 = scmp.eq.s32.totalorder %s18, 0
    %p108 = por %p106, %p107
    %s109 = ssub.s32 %s12, %s19
    %p110 = scmp.eq.s32.totalorder %s109, 0
    %s112 = sadd.s32 %s111, 1
    %s113 = scalar_select %p110, %s111, %s112
    %p116 = pneg %p110
    %p117 = scmp.eq.s32.totalorder %s12, 1
    %p118 = por %p116, %p117
    %p119 = scmp.ne.s32.totalorder %s111, %s114
    %p120 = scmp.eq.s32.totalorder %s12, 0
    %p121 = por %p119, %p120
    %p122 = scmp.ne.s32.totalorder %s111, %s114
    %p123 = scmp.eq.s32.totalorder %s17, 1
    %p124 = por %p122, %p123
    %p125 = scmp.ne.s32.totalorder %s114, %s115
    %p126 = scmp.eq.s32.totalorder %s17, 0
    %p127 = por %p125, %p126
    %p128 = scmp.ne.s32.totalorder %s114, %s115
    %p129 = scmp.eq.s32.totalorder %s18, 1
    %p130 = por %p128, %p129
    %p132 = scmp.ne.s32.totalorder %s115, %s131
    %p133 = scmp.eq.s32.totalorder %s18, 0
    %p134 = por %p132, %p133
    %s135 = ssub.s32 %s12, %s19
    %p136 = scmp.eq.s32.totalorder %s135, 0
    %s138 = sadd.s32 %s137, 1
    %s139 = scalar_select %p136, %s137, %s138
    %p142 = pneg %p136
    %p143 = scmp.eq.s32.totalorder %s12, 1
    %p144 = por %p142, %p143
    %p145 = scmp.ne.s32.totalorder %s137, %s140
    %p146 = scmp.eq.s32.totalorder %s12, 0
    %p147 = por %p145, %p146
    %p148 = scmp.ne.s32.totalorder %s137, %s140
    %p149 = scmp.eq.s32.totalorder %s17, 1
    %p150 = por %p148, %p149
    %p151 = scmp.ne.s32.totalorder %s140, %s141
    %p152 = scmp.eq.s32.totalorder %s17, 0
    %p153 = por %p151, %p152
    %p154 = scmp.ne.s32.totalorder %s140, %s141
    %p155 = scmp.eq.s32.totalorder %s18, 1
    %p156 = por %p154, %p155
    %p158 = scmp.ne.s32.totalorder %s141, %s157
    %p159 = scmp.eq.s32.totalorder %s18, 0
    %p160 = por %p158, %p159
    %p161 = scmp.le.s32.totalorder 1, %s12
    %p162 = scmp.lt.s32.totalorder %s12, 3
    %p163 = pnand %p161, %p162
    %p164 = pneg %p163
    // Predicated region
    $region9: #{residue_block.4} parent=5 // pred_check
      _
    $region10: #{residue_block.4} parent=5 // pred_check_branch
      %166 = sbr.rel (%p163) target = $region12
    $region11: #{residue_block.4} parent=5 // pred_region
      %s167 = ssub.s32 %s12, 1
      // Predicated region
      $region13: #{residue_block.4} parent=11 // pred_check
        %p168 = pneg %p59
      $region14: #{residue_block.4} parent=11 // pred_check_branch
        %170 = sbr.rel (%p168) target = $region16
      $region15: #{residue_block.4} parent=11 // pred_region
        _
      $region16: #{residue_block.4} parent=11 // pred_fallthru
        _
      // Predicated region
      $region17: #{residue_block.4} parent=11 // pred_check
        %p171 = pneg %p80
      $region18: #{residue_block.4} parent=11 // pred_check_branch
        %173 = sbr.rel (%p171) target = $region20
      $region19: #{residue_block.4} parent=11 // pred_region
        _
      $region20: #{residue_block.4} parent=11 // pred_fallthru
        _
      // Predicated region
      $region21: #{residue_block.4} parent=11 // pred_check
        %p174 = pneg %p101
      $region22: #{residue_block.4} parent=11 // pred_check_branch
        %176 = sbr.rel (%p174) target = $region24
      $region23: #{residue_block.4} parent=11 // pred_region
        _
      $region24: #{residue_block.4} parent=11 // pred_fallthru
        _
    $region12: #{residue_block.4} parent=5 // pred_fallthru
      _
    %p177 = scmp.lt.s32.totalorder %s12, 2
    // Predicated region
    $region25: #{residue_block.4} parent=5 // pred_check
      %p178 = pneg %p177
    $region26: #{residue_block.4} parent=5 // pred_check_branch
      %180 = sbr.rel (%p178) target = $region28
    $region27: #{residue_block.4} parent=5 // pred_region
      // Predicated region
      $region29: #{residue_block.4} parent=27 // pred_check
        %p181 = pneg %p32
      $region30: #{residue_block.4} parent=27 // pred_check_branch
        %183 = sbr.rel (%p181) target = $region32
      $region31: #{residue_block.4} parent=27 // pred_region
        %p184 = scmp.lt.s32.totalorder %s12, 1
        %s185 = scalar_select %p184, %s12, 1
        %s186 = smul.addr %s185, 2
        %s187 = smul.addr %s186, 8
        %s188 = scalar_lea.vmem %s0, %s187
      $region32: #{residue_block.4} parent=27 // pred_fallthru
        _
    $region28: #{residue_block.4} parent=5 // pred_fallthru
      _
    %p189 = scmp.le.s32.totalorder 1, %s12
    %p190 = scmp.lt.s32.totalorder %s12, 3
    %p191 = pnand %p189, %p190
    %p192 = pneg %p191
    // Predicated region
    $region33: #{residue_block.4} parent=5 // pred_check
      _
    $region34: #{residue_block.4} parent=5 // pred_check_branch
      %194 = sbr.rel (%p191) target = $region36
    $region35: #{residue_block.4} parent=5 // pred_region
      %s195 = ssub.s32 %s12, 1
      %p196 = scmp.lt.s32.totalorder %s17, 1
      %s197 = scalar_select %p196, %s17, 1
      %s198 = smul.addr %s197, 2
      %s199 = smul.addr %s198, 8
      %s200 = scalar_lea.vmem %s0, %s199
      %p201 = pneg %p38
      %p202 = pneg %p35
      %p203 = pneg %p59
      %p204 = pneg %p56
      %p205 = pneg %p80
      %p206 = pneg %p77
      %p207 = pneg %p101
      %p208 = pneg %p98
      %p209 = pneg %p127
      %p210 = pneg %p124
      %p211 = scmp.lt.s32.totalorder %s17, 1
      %s212 = scalar_select %p211, %s17, 1
      %s213 = smul.addr %s212, 2
      %s214 = smul.addr %s213, 8
      %s215 = scalar_lea.vmem %s4, %s214
      %p216 = pneg %p153
      %p217 = pneg %p150
      %p218 = scmp.lt.s32.totalorder %s17, 1
      %s219 = scalar_select %p218, %s17, 1
      %s220 = smul.addr %s219, 2
      %s221 = scalar_lea.vmem %s5, %s220
      %p222 = scmp.lt.s32.totalorder %s17, 1
      %s223 = scalar_select %p222, %s17, 1
      %s224 = smul.addr %s223, 2
      %s225 = smul.addr %s224, 8
      %s226 = scalar_lea.vmem %s0, %s225
      %p227 = scmp.lt.s32.totalorder %s17, 1
      %s228 = scalar_select %p227, %s17, 1
      %s229 = smul.addr %s228, 2
      %s230 = smul.addr %s229, 8
      %s231 = scalar_lea.vmem %s4, %s230
      %p232 = scmp.lt.s32.totalorder %s17, 1
      %s233 = scalar_select %p232, %s17, 1
      %s234 = smul.addr %s233, 2
      %s235 = scalar_lea.vmem %s5, %s234
      %v236 = vld [vmem:[%s226] sm:$0xff]
      %v237 = vld [vmem:[%s226 + $0x8] sm:$0xff]
      %v238 = vld [vmem:[%s1] sm:$0x1]
      %v240 = vlaneseq
      %v241 = vshrl.u32 %v240, 7
      %v242 = vsub.s32 0, %v241
      %v243 = vrot.slane %v238, %v242
      %v245 = vmul.f32 %v236, %v243
      %v246 = vmul.f32 %v237, %v243
      %v247 = vld [vmem:[%s2] sm:$0x1]
      %v249 = vlaneseq
      %v250 = vshrl.u32 %v249, 7
      %v251 = vsub.s32 0, %v250
      %v252 = vrot.slane %v247, %v251
      %v254 = vadd.f32 %v245, %v252
      %v255 = vadd.f32 %v246, %v252
      %v256 = vmax.f32 %v254, 0.0
      %v257 = vmax.f32 %v255, 0.0
      %vm260 = vcmask 1040384
      %v261 = vrot.slane %v256, 7
      %v262 = vrot.slane %v257, 7
      %v263 = vsel %vm260, %v261, %v262
      %v266 = vsel %vm260, 0.0, %v261
      %vm267 = vcmask 1046528
      %v268 = vrot.slane %v256, 1
      %v269 = vrot.slane %v257, 1
      %v270 = vsel %vm267, %v268, %v269
      %v273 = vsel %vm267, %v269, 0.0
      %v274 = vld [vmem:[%s3] sm:$0xff]
      %v275 = vld [vmem:[%s3 + $0x8] sm:$0xff]
      %v276 = vld [vmem:[%s3 + $0x10] sm:$0xff]
      %v277 = vld [vmem:[%s3 + $0x18] sm:$0xff]
      %v278 = vld [vmem:[%s3 + $0x20] sm:$0xff]
      %v279 = vld [vmem:[%s3 + $0x28] sm:$0xff]
      %v280 = vld [vmem:[%s3 + $0x30] sm:$0xff]
      %v281 = vld [vmem:[%s3 + $0x38] sm:$0xff]
      %v282 = vld [vmem:[%s3 + $0x40] sm:$0xff]
      %v283 = vld [vmem:[%s3 + $0x48] sm:$0xff]
      %v284 = vld [vmem:[%s3 + $0x50] sm:$0xff]
      %v285 = vld [vmem:[%s3 + $0x58] sm:$0xff]
      %v286 = vld [vmem:[%s3 + $0x60] sm:$0xff]
      %v287 = vld [vmem:[%s3 + $0x68] sm:$0xff]
      %v288 = vld [vmem:[%s3 + $0x70] sm:$0xff]
      %v289 = vld [vmem:[%s3 + $0x78] sm:$0xff]
      %v290 = vld [vmem:[%s3 + $0x80] sm:$0xff]
      %v291 = vld [vmem:[%s3 + $0x88] sm:$0xff]
      %v292 = vld [vmem:[%s3 + $0x90] sm:$0xff]
      %v293 = vld [vmem:[%s3 + $0x98] sm:$0xff]
      %v294 = vld [vmem:[%s3 + $0xa0] sm:$0xff]
      %v295 = vld [vmem:[%s3 + $0xa8] sm:$0xff]
      %v296 = vld [vmem:[%s3 + $0xb0] sm:$0xff]
      %v297 = vld [vmem:[%s3 + $0xb8] sm:$0xff]
      %v298 = vld [vmem:[%s3 + $0xc0] sm:$0xff]
      %v299 = vld [vmem:[%s3 + $0xc8] sm:$0xff]
      %v300 = vld [vmem:[%s3 + $0xd0] sm:$0xff]
      %v301 = vld [vmem:[%s3 + $0xd8] sm:$0xff]
      %v302 = vld [vmem:[%s3 + $0xe0] sm:$0xff]
      %v303 = vld [vmem:[%s3 + $0xe8] sm:$0xff]
      %v304 = vld [vmem:[%s3 + $0xf0] sm:$0xff]
      %v305 = vld [vmem:[%s3 + $0xf8] sm:$0xff]
      %v306 = vld [vmem:[%s3 + $0x100] sm:$0xff]
      %v307 = vld [vmem:[%s3 + $0x108] sm:$0xff]
      %v308 = vld [vmem:[%s3 + $0x110] sm:$0xff]
      %v309 = vld [vmem:[%s3 + $0x118] sm:$0xff]
      %v310 = vld [vmem:[%s3 + $0x120] sm:$0xff]
      %v311 = vld [vmem:[%s3 + $0x128] sm:$0xff]
      %v312 = vld [vmem:[%s3 + $0x130] sm:$0xff]
      %v313 = vld [vmem:[%s3 + $0x138] sm:$0xff]
      %v314 = vld [vmem:[%s3 + $0x140] sm:$0xff]
      %v315 = vld [vmem:[%s3 + $0x148] sm:$0xff]
      %v316 = vld [vmem:[%s3 + $0x150] sm:$0xff]
      %v317 = vld [vmem:[%s3 + $0x158] sm:$0xff]
      %v318 = vld [vmem:[%s3 + $0x160] sm:$0xff]
      %v319 = vld [vmem:[%s3 + $0x168] sm:$0xff]
      %v320 = vld [vmem:[%s3 + $0x170] sm:$0xff]
      %v321 = vld [vmem:[%s3 + $0x178] sm:$0xff]
      %322 = vmatprep.subr.mxu0 0.0
      %323 = vmatpush1.msra.mxu0 %v274
      %324 = vmatprep.subr.mxu0 0.0
      %325 = vmatpush1.msra.mxu0 %v275
      %326 = vmatprep.subr.mxu0 0.0
      %327 = vmatpush1.msra.mxu0 %v276
      %328 = vmatprep.subr.mxu0 0.0
      %329 = vmatpush1.msra.mxu0 %v277
      %330 = vmatprep.subr.mxu0 0.0
      %331 = vmatpush1.msra.mxu0 %v278
      %332 = vmatprep.subr.mxu0 0.0
      %333 = vmatpush1.msra.mxu0 %v279
      %334 = vmatprep.subr.mxu0 0.0
      %335 = vmatpush1.msra.mxu0 %v280
      %336 = vmatprep.subr.mxu0 0.0
      %337 = vmatpush1.msra.mxu0 %v281
      %338 = vmatprep.subr.mxu0 0.0
      %339 = vmatpush1.msra.mxu0 %v282
      %340 = vmatprep.subr.mxu0 0.0
      %341 = vmatpush1.msra.mxu0 %v283
      %342 = vmatprep.subr.mxu0 0.0
      %343 = vmatpush1.msra.mxu0 %v284
      %344 = vmatprep.subr.mxu0 0.0
      %345 = vmatpush1.msra.mxu0 %v285
      %346 = vmatprep.subr.mxu0 0.0
      %347 = vmatpush1.msra.mxu0 %v286
      %348 = vmatprep.subr.mxu0 0.0
      %349 = vmatpush1.msra.mxu0 %v287
      %350 = vmatprep.subr.mxu0 0.0
      %351 = vmatpush1.msra.mxu0 %v288
      %352 = vmatprep.subr.mxu0 0.0
      %353 = vmatpush1.msra.mxu0 %v289
      %354 = vmatprep.subr.mxu0 0.0
      %355 = vmatpush1.msra.mxu0 %v290
      %356 = vmatprep.subr.mxu0 0.0
      %357 = vmatpush1.msra.mxu0 %v291
      %358 = vmatprep.subr.mxu0 0.0
      %359 = vmatpush1.msra.mxu0 %v292
      %360 = vmatprep.subr.mxu0 0.0
      %361 = vmatpush1.msra.mxu0 %v293
      %362 = vmatprep.subr.mxu0 0.0
      %363 = vmatpush1.msra.mxu0 %v294
      %364 = vmatprep.subr.mxu0 0.0
      %365 = vmatpush1.msra.mxu0 %v295
      %366 = vmatprep.subr.mxu0 0.0
      %367 = vmatpush1.msra.mxu0 %v296
      %368 = vmatprep.subr.mxu0 0.0
      %369 = vmatpush1.msra.mxu0 %v297
      %370 = vmatprep.subr.mxu0 0.0
      %371 = vmatpush1.msra.mxu0 %v298
      %372 = vmatprep.subr.mxu0 0.0
      %373 = vmatpush1.msra.mxu0 %v299
      %374 = vmatprep.subr.mxu0 0.0
      %375 = vmatpush1.msra.mxu0 %v300
      %376 = vmatprep.subr.mxu0 0.0
      %377 = vmatpush1.msra.mxu0 %v301
      %378 = vmatprep.subr.mxu0 0.0
      %379 = vmatpush1.msra.mxu0 %v302
      %380 = vmatprep.subr.mxu0 0.0
      %381 = vmatpush1.msra.mxu0 %v303
      %382 = vmatprep.subr.mxu0 0.0
      %383 = vmatpush1.msra.mxu0 %v304
      %384 = vmatprep.subr.mxu0 0.0
      %385 = vmatpush1.msra.mxu0 %v305
      %386 = vmatprep.mubr.f32.mxu0 %v256
      %387 = vmatmul.mubr.f32.gmra.mrb[0].mxu0 %v266
      %v388 = vpop.f32.mrb[0].mxu0
      %v389 = vadd.f32 0.0, %v388
      %v390 = vpop.f32.mrb[0].mxu0
      %391 = vmatprep.mubr.f32.mxu0 %v257
      %392 = vmatmul.mubr.f32.gmra.mrb[0].mxu0 %v263
      %v393 = vpop.f32.mrb[0].mxu0
      %v394 = vadd.f32 0.0, %v393
      %v395 = vpop.f32.mrb[0].mxu0
      %396 = vdwg.mxu0
      %397 = vmatprep.subr.mxu0 0.0
      %398 = vmatpush1.msra.mxu0 %v306
      %399 = vmatprep.subr.mxu0 0.0
      %400 = vmatpush1.msra.mxu0 %v307
      %401 = vmatprep.subr.mxu0 0.0
      %402 = vmatpush1.msra.mxu0 %v308
      %403 = vmatprep.subr.mxu0 0.0
      %404 = vmatpush1.msra.mxu0 %v309
      %405 = vmatprep.subr.mxu0 0.0
      %406 = vmatpush1.msra.mxu0 %v310
      %407 = vmatprep.subr.mxu0 0.0
      %408 = vmatpush1.msra.mxu0 %v311
      %409 = vmatprep.subr.mxu0 0.0
      %410 = vmatpush1.msra.mxu0 %v312
      %411 = vmatprep.subr.mxu0 0.0
      %412 = vmatpush1.msra.mxu0 %v313
      %413 = vmatprep.subr.mxu0 0.0
      %414 = vmatpush1.msra.mxu0 %v314
      %415 = vmatprep.subr.mxu0 0.0
      %416 = vmatpush1.msra.mxu0 %v315
      %417 = vmatprep.subr.mxu0 0.0
      %418 = vmatpush1.msra.mxu0 %v316
      %419 = vmatprep.subr.mxu0 0.0
      %420 = vmatpush1.msra.mxu0 %v317
      %421 = vmatprep.subr.mxu0 0.0
      %422 = vmatpush1.msra.mxu0 %v318
      %423 = vmatprep.subr.mxu0 0.0
      %424 = vmatpush1.msra.mxu0 %v319
      %425 = vmatprep.subr.mxu0 0.0
      %426 = vmatpush1.msra.mxu0 %v320
      %427 = vmatprep.subr.mxu0 0.0
      %428 = vmatpush1.msra.mxu0 %v321
      %429 = vmatprep.subr.mxu0 0.0
      %430 = vmatpush1.msra.mxu0 0.0
      %431 = vmatprep.subr.mxu0 0.0
      %432 = vmatpush1.msra.mxu0 0.0
      %433 = vmatprep.subr.mxu0 0.0
      %434 = vmatpush1.msra.mxu0 0.0
      %435 = vmatprep.subr.mxu0 0.0
      %436 = vmatpush1.msra.mxu0 0.0
      %437 = vmatprep.subr.mxu0 0.0
      %438 = vmatpush1.msra.mxu0 0.0
      %439 = vmatprep.subr.mxu0 0.0
      %440 = vmatpush1.msra.mxu0 0.0
      %441 = vmatprep.subr.mxu0 0.0
      %442 = vmatpush1.msra.mxu0 0.0
      %443 = vmatprep.subr.mxu0 0.0
      %444 = vmatpush1.msra.mxu0 0.0
      %445 = vmatprep.subr.mxu0 0.0
      %446 = vmatpush1.msra.mxu0 0.0
      %447 = vmatprep.subr.mxu0 0.0
      %448 = vmatpush1.msra.mxu0 0.0
      %449 = vmatprep.subr.mxu0 0.0
      %450 = vmatpush1.msra.mxu0 0.0
      %451 = vmatprep.subr.mxu0 0.0
      %452 = vmatpush1.msra.mxu0 0.0
      %453 = vmatprep.subr.mxu0 0.0
      %454 = vmatpush1.msra.mxu0 0.0
      %455 = vmatprep.subr.mxu0 0.0
      %456 = vmatpush1.msra.mxu0 0.0
      %457 = vmatprep.subr.mxu0 0.0
      %458 = vmatpush1.msra.mxu0 0.0
      %459 = vmatprep.subr.mxu0 0.0
      %460 = vmatpush1.msra.mxu0 0.0
      %461 = vmatprep.mubr.f32.mxu0 0.0
      %462 = vmatmul.mubr.f32.gmra.mrb[0].mxu0 %v270
      %v463 = vpop.f32.mrb[0].mxu0
      %v464 = vadd.f32 %v389, %v463
      %v465 = vpop.f32.mrb[0].mxu0
      %466 = vmatprep.mubr.f32.mxu0 0.0
      %467 = vmatmul.mubr.f32.gmra.mrb[0].mxu0 %v273
      %v468 = vpop.f32.mrb[0].mxu0
      %v469 = vadd.f32 %v394, %v468
      %v470 = vpop.f32.mrb[0].mxu0
      %471 = vdwg.mxu0
      %472 = vst [vmem:[%s231] sm:$0xff] %v464
      %473 = vst [vmem:[%s231 + $0x8] sm:$0xff] %v469
      %v474 = vadd.f32 %v464, %v469
      %v475 = vrot.slane %v474, 4
      %v476 = vadd.f32 %v474, %v475
      %v477 = vrot.slane %v476, 2
      %v478 = vadd.f32 %v476, %v477
      %v479 = vrot.slane %v478, 1
      %v480 = vadd.f32 %v478, %v479
      %v481 = vmul.f32 %v464, %v464
      %v482 = vmul.f32 %v469, %v469
      %v483 = vadd.f32 %v481, %v482
      %v484 = vrot.slane %v483, 4
      %v485 = vadd.f32 %v483, %v484
      %v486 = vrot.slane %v485, 2
      %v487 = vadd.f32 %v485, %v486
      %v488 = vrot.slane %v487, 1
      %v489 = vadd.f32 %v487, %v488
      %v490 = vsel %vm260, %v480, %v489
      %491 = vst [vmem:[%s235] sm:$0x3] %v490
      %p492 = scmp.lt.s32.totalorder %s17, 1
      %s493 = scalar_select %p492, %s17, 1
      %s494 = smul.addr %s493, 2
      %s495 = smul.addr %s494, 8
      %s496 = scalar_lea.vmem %s4, %s495
      %p497 = scmp.lt.s32.totalorder %s17, 1
      %s498 = scalar_select %p497, %s17, 1
      %s499 = smul.addr %s498, 2
      %s500 = scalar_lea.vmem %s5, %s499
      // Predicated region
      $region37: #{residue_block.4} parent=35 // pred_check
        %p501 = pneg %p124
      $region38: #{residue_block.4} parent=35 // pred_check_branch
        %503 = sbr.rel (%p501) target = $region40
      $region39: #{residue_block.4} parent=35 // pred_region
        _
      $region40: #{residue_block.4} parent=35 // pred_fallthru
        _
      // Predicated region
      $region41: #{residue_block.4} parent=35 // pred_check
        %p504 = pneg %p150
      $region42: #{residue_block.4} parent=35 // pred_check_branch
        %506 = sbr.rel (%p504) target = $region44
      $region43: #{residue_block.4} parent=35 // pred_region
        _
      $region44: #{residue_block.4} parent=35 // pred_fallthru
        _
    $region36: #{residue_block.4} parent=5 // pred_fallthru
      _
    %p507 = scmp.le.s32.totalorder 2, %s12
    // Predicated region
    $region45: #{residue_block.4} parent=5 // pred_check
      %p508 = pneg %p507
    $region46: #{residue_block.4} parent=5 // pred_check_branch
      %510 = sbr.rel (%p508) target = $region48
    $region47: #{residue_block.4} parent=5 // pred_region
      %s511 = ssub.s32 %s12, 2
      // Predicated region
      $region49: #{residue_block.4} parent=47 // pred_check
        %p512 = pneg %p130
      $region50: #{residue_block.4} parent=47 // pred_check_branch
        %514 = sbr.rel (%p512) target = $region52
      $region51: #{residue_block.4} parent=47 // pred_region
        %p515 = scmp.lt.s32.totalorder %s18, 1
        %s516 = scalar_select %p515, %s18, 1
        %s517 = smul.addr %s516, 2
        %s518 = smul.addr %s517, 8
        %s519 = scalar_lea.vmem %s4, %s518
      $region52: #{residue_block.4} parent=47 // pred_fallthru
        _
      // Predicated region
      $region53: #{residue_block.4} parent=47 // pred_check
        %p520 = pneg %p156
      $region54: #{residue_block.4} parent=47 // pred_check_branch
        %522 = sbr.rel (%p520) target = $region56
      $region55: #{residue_block.4} parent=47 // pred_region
        %p523 = scmp.lt.s32.totalorder %s18, 1
        %s524 = scalar_select %p523, %s18, 1
        %s525 = smul.addr %s524, 2
        %s526 = scalar_lea.vmem %s5, %s525
      $region56: #{residue_block.4} parent=47 // pred_fallthru
        _
    $region48: #{residue_block.4} parent=5 // pred_fallthru
      _
  $region6: #{residue_block.4} parent=0 // loop_footer
    %s16 = sadd.s32 1, %s12
  $region7: #{residue_block.4} parent=0 // loop_footer_branch
    %11 = sbr.rel target = $region3
  $region8: #{residue_block.4} parent=0 // loop_exit
    _

</llo_original>
